<compile_context>
chip_gen: v6e
topology: v6e:2x2x1
jax: 0.10.0
libtpu: 0.0.40
codegen_flags: <defaults>
</compile_context>

<pallas_src>
import functools

import jax
import jax.numpy as jnp
from jax.experimental import pallas as pl
from jax.experimental.pallas import tpu as pltpu

_BN_EPS = 1e-5


def _round_up(x, m):
    return ((x + m - 1) // m) * m


def _vmem_budget_bytes():
    """Per-generation VMEM budget (v7x halves per-core VMEM vs v5e/v6e)."""
    cap = 64 * 1024 * 1024  # conservative fallback = v7x per-core VMEM
    try:
        info = pltpu.get_tpu_info()
        cap = int(getattr(info, "vmem_capacity_bytes", cap))
    except Exception:
        pass
    return (cap * 3) // 4


def _pick_row_tile(n, d_in, h_pad, out_pad, vmem_limit):
    """Largest row tile whose double-buffered streams + resident params fit VMEM."""
    # Streaming bytes per row (double-buffered); h1/h2 are bf16.
    bytes_per_row = max(
        2 * (d_in * 2 + h_pad * 2),      # pass 1: bf16 x in, bf16 h1 out
        2 * (h_pad * 2 + h_pad * 2),     # pass 2: bf16 h1 in, bf16 h2 out
        2 * (h_pad * 2 + out_pad * 4),   # pass 3: bf16 h2 in, f32 logits out
    )
    # Resident constant-index operands (Pallas still double-buffers them).
    resident = 2 * max(
        d_in * h_pad * 2 + h_pad * 4,                         # pass 1: w1, b1
        h_pad * h_pad * 2 + 3 * h_pad * 4,                    # pass 2: w2, scale/shift/b2
        h_pad * out_pad * 2 + 2 * h_pad * 4 + out_pad * 4,    # pass 3: w3, scale/shift, b3
    )
    budget = max(int(vmem_limit * 0.75) - resident, 0)
    tm = 4096
    while tm > 8 and tm * bytes_per_row > budget:
        tm //= 2
    return int(max(8, min(tm, _round_up(n, 8))))


# --------------------------------------------------------------------------
# Kernels
# --------------------------------------------------------------------------

def _linear_stats_kernel(x_ref, w_ref, b_ref, h_ref, sum_ref, ssq_ref):
    """h = x @ w + b (bf16 MXU, f32 acc), stored bf16; per-tile column stats."""
    h = jnp.dot(x_ref[...], w_ref[...], preferred_element_type=jnp.float32)
    h = h + b_ref[...]
    hb = h.astype(h_ref.dtype)          # bf16 storage (halves HBM traffic)
    h_ref[...] = hb
    h32 = hb.astype(jnp.float32)        # stats on exactly the stored values
    sum_ref[...] = jnp.sum(h32, axis=0, keepdims=True)[None]
    ssq_ref[...] = jnp.sum(h32 * h32, axis=0, keepdims=True)[None]


def _bn_relu_linear_stats_kernel(h_ref, scale_ref, shift_ref, w_ref, b_ref,
                                 h2_ref, sum_ref, ssq_ref):
    """a = relu(h*scale + shift); h2 = a @ w + b (bf16 stored); per-tile stats."""
    a = jnp.maximum(h_ref[...].astype(jnp.float32) * scale_ref[...]
                    + shift_ref[...], 0.0)
    h2 = jnp.dot(a.astype(jnp.bfloat16), w_ref[...],
                 preferred_element_type=jnp.float32) + b_ref[...]
    hb = h2.astype(h2_ref.dtype)
    h2_ref[...] = hb
    h32 = hb.astype(jnp.float32)
    sum_ref[...] = jnp.sum(h32, axis=0, keepdims=True)[None]
    ssq_ref[...] = jnp.sum(h32 * h32, axis=0, keepdims=True)[None]


def _bn_relu_linear_out_kernel(h_ref, scale_ref, shift_ref, w_ref, b_ref, o_ref):
    """a = relu(h*scale + shift); out = a @ w + b (lane-dense padded columns)."""
    a = jnp.maximum(h_ref[...].astype(jnp.float32) * scale_ref[...]
                    + shift_ref[...], 0.0)
    o_ref[...] = (jnp.dot(a.astype(jnp.bfloat16), w_ref[...],
                          preferred_element_type=jnp.float32)
                  + b_ref[...]).astype(o_ref.dtype)


# --------------------------------------------------------------------------
# Wrapper
# --------------------------------------------------------------------------

@functools.partial(jax.jit, static_argnames=("row_tile",))
def logistic_regression_forward(feats, params, *, row_tile=None):
    """feats: (N, input_dim) float32. params: dict of weights (see init_params).

    NOTE: this path assumes norm_type='batch' with training-mode (batch)
    statistics, as in the reference module's default configuration.
    """
    n, d_in = feats.shape
    h_dim = params["w1"].shape[1]
    out_dim = params["w3"].shape[1]
    f32, bf16 = jnp.float32, jnp.bfloat16

    # Lane-dense padding of hidden and class dimensions.
    h_pad = _round_up(max(h_dim, 128), 128)
    out_pad = _round_up(max(out_dim, 128), 128)

    vmem_limit = _vmem_budget_bytes()
    if row_tile is None:
        tm = _pick_row_tile(n, d_in, h_pad, out_pad, vmem_limit)
    else:
        tm = int(max(8, min(_round_up(row_tile, 8), _round_up(n, 8))))
    n_pad = _round_up(n, tm)
    grid = (n_pad // tm,)
    n_extra = n_pad - n  # zero-padded rows; stats corrected in the wrapper

    def pad_cols(a, total):
        return jnp.pad(a, ((0, 0), (0, total - a.shape[1])))

    # bf16 matmul operands. Padded weight/bias/gamma columns are zero, so the
    # padded activation columns stay exactly 0 through BN/ReLU and contribute
    # nothing through the zero weight rows of the next layer.
    x = feats.astype(bf16)
    if n_extra:
        x = jnp.pad(x, ((0, n_extra), (0, 0)))
    w1 = pad_cols(params["w1"], h_pad).astype(bf16)
    b1 = pad_cols(params["b1"], h_pad).astype(f32)
    g1 = pad_cols(params["g1"], h_pad).astype(f32)
    be1 = pad_cols(params["be1"], h_pad).astype(f32)
    w2 = jnp.pad(params["w2"], ((0, h_pad - h_dim), (0, h_pad - h_dim))).astype(bf16)
    b2 = pad_cols(params["b2"], h_pad).astype(f32)
    g2 = pad_cols(params["g2"], h_pad).astype(f32)
    be2 = pad_cols(params["be2"], h_pad).astype(f32)
    w3 = jnp.pad(params["w3"], ((0, h_pad - h_dim), (0, out_pad - out_dim))).astype(bf16)
    b3 = pad_cols(params["b3"], out_pad).astype(f32)

    def row_spec(cols):
        return pl.BlockSpec((tm, cols), lambda i: (i, 0))

    def const_spec(shape):
        # Constant block index: parameter stays resident in VMEM across the grid.
        return pl.BlockSpec(shape, lambda i: (0,) * len(shape))

    # Per-tile partial stats: each grid step writes its own (1,1,H) block, so
    # every grid axis is "parallel" (v7x megacore) and no RMW accumulator.
    stat_spec = pl.BlockSpec((1, 1, h_pad), lambda i: (i, 0, 0))
    stat_shape = jax.ShapeDtypeStruct((grid[0], 1, h_pad), f32)

    cparams = pltpu.CompilerParams(
        dimension_semantics=("parallel",), vmem_limit_bytes=vmem_limit)

    # ---- Pass 1: h1 = x @ w1 + b1 ; per-tile column sum / sumsq ------------
    h1, s1, q1 = pl.pallas_call(
        _linear_stats_kernel,
        grid=grid,
        in_specs=[row_spec(d_in), const_spec((d_in, h_pad)), const_spec((1, h_pad))],
        out_specs=[row_spec(h_pad), stat_spec, stat_spec],
        out_shape=[jax.ShapeDtypeStruct((n_pad, h_pad), bf16), stat_shape, stat_shape],
        compiler_params=cparams,
        cost_estimate=pl.CostEstimate(
            flops=2 * n_pad * d_in * h_pad, transcendentals=0,
            bytes_accessed=n_pad * d_in * 2 + n_pad * h_pad * 2 + d_in * h_pad * 2),
    )(x, w1, b1)

    def fold_bn(psum, pssq, pad_row_val, gamma, beta):
        # Reduce per-tile partials in f32, remove the padded rows' (identical,
        # wrapper-reproducible) contribution, then fold BN into scale/shift.
        s = jnp.sum(psum, axis=0)   # (1, h_pad)
        q = jnp.sum(pssq, axis=0)
        if n_extra:
            v = pad_row_val.astype(f32)
            s = s - n_extra * v
            q = q - n_extra * v * v
        mean = s / n
        var = jnp.maximum(q / n - mean * mean, 0.0)
        scale = gamma * jax.lax.rsqrt(var + _BN_EPS)
        shift = beta - mean * scale
        return scale, shift

    # Padded x rows are exact zeros, so each stored padded-row h1 is bf16(b1).
    pad1 = b1.astype(bf16)
    scale1, shift1 = fold_bn(s1, q1, pad1, g1, be1)

    # ---- Pass 2: a1 = relu(BN(h1)); h2 = a1 @ w2 + b2 ; per-tile stats ------
    h2, s2, q2 = pl.pallas_call(
        _bn_relu_linear_stats_kernel,
        grid=grid,
        in_specs=[row_spec(h_pad), const_spec((1, h_pad)), const_spec((1, h_pad)),
                  const_spec((h_pad, h_pad)), const_spec((1, h_pad))],
        out_specs=[row_spec(h_pad), stat_spec, stat_spec],
        out_shape=[jax.ShapeDtypeStruct((n_pad, h_pad), bf16), stat_shape, stat_shape],
        compiler_params=cparams,
        cost_estimate=pl.CostEstimate(
            flops=2 * n_pad * h_pad * h_pad, transcendentals=0,
            bytes_accessed=2 * n_pad * h_pad * 2 + h_pad * h_pad * 2),
    )(h1, scale1, shift1, w2, b2)

    # Each padded row produced the same h2 row; reproduce it and subtract.
    a_pad = jnp.maximum(pad1.astype(f32) * scale1 + shift1, 0.0)
    pad2 = (jnp.dot(a_pad.astype(bf16), w2, preferred_element_type=f32) + b2).astype(bf16)
    scale2, shift2 = fold_bn(s2, q2, pad2, g2, be2)

    # ---- Pass 3: a2 = relu(BN(h2)); out = a2 @ w3 + b3 ----------------------
    out = pl.pallas_call(
        _bn_relu_linear_out_kernel,
        grid=grid,
        in_specs=[row_spec(h_pad), const_spec((1, h_pad)), const_spec((1, h_pad)),
                  const_spec((h_pad, out_pad)), const_spec((1, out_pad))],
        out_specs=row_spec(out_pad),
        out_shape=jax.ShapeDtypeStruct((n_pad, out_pad), f32),
        compiler_params=cparams,
        cost_estimate=pl.CostEstimate(
            flops=2 * n_pad * h_pad * out_pad, transcendentals=0,
            bytes_accessed=n_pad * h_pad * 2 + n_pad * out_pad * 4
                           + h_pad * out_pad * 2),
    )(h2, scale2, shift2, w3, b3)

    return out[:n, :out_dim]


# --------------------------------------------------------------------------
# Init + reference
# --------------------------------------------------------------------------

def init_params(key, input_dim, hidden_dim, output_dim):
    """Deterministic synthetic init. Linear weights stored as (in, out)."""
    ks = jax.random.split(key, 6)

    def linear(kw, kb, fan_in, fan_out):
        bound = 1.0 / jnp.sqrt(jnp.float32(fan_in))
        w = jax.random.uniform(kw, (fan_in, fan_out), jnp.float32, -bound, bound)
        b = jax.random.uniform(kb, (1, fan_out), jnp.float32, -bound, bound)
        return w, b

    w1, b1 = linear(ks[0], ks[1], input_dim, hidden_dim)
    w2, b2 = linear(ks[2], ks[3], hidden_dim, hidden_dim)
    w3, b3 = linear(ks[4], ks[5], hidden_dim, output_dim)

    # BatchNorm1d defaults: weight (gamma) = 1, bias (beta) = 0.
    g1 = jnp.ones((1, hidden_dim), jnp.float32)
    be1 = jnp.zeros((1, hidden_dim), jnp.float32)
    g2 = jnp.ones((1, hidden_dim), jnp.float32)
    be2 = jnp.zeros((1, hidden_dim), jnp.float32)

    return dict(w1=w1, b1=b1, g1=g1, be1=be1,
                w2=w2, b2=b2, g2=g2, be2=be2,
                w3=w3, b3=b3)


def _reference_forward(feats, p):
    """Pure-JAX reference following the PyTorch math (bias + centered biased
    variance), with the same bf16-matmul / f32-accumulate / bf16-stored-h
    precision as the kernel so the comparison isolates kernel correctness."""
    bf = jnp.bfloat16

    def bn_relu(h, g, b):
        m = jnp.mean(h, axis=0, keepdims=True)
        v = jnp.mean((h - m) ** 2, axis=0, keepdims=True)
        return jnp.maximum((h - m) * jax.lax.rsqrt(v + _BN_EPS) * g + b, 0.0)

    h = jnp.dot(feats.astype(bf), p["w1"].astype(bf),
                preferred_element_type=jnp.float32) + p["b1"]
    h = h.astype(bf).astype(jnp.float32)         # kernel stores h1 in bf16
    h = bn_relu(h, p["g1"], p["be1"])
    h = jnp.dot(h.astype(bf), p["w2"].astype(bf),
                preferred_element_type=jnp.float32) + p["b2"]
    h = h.astype(bf).astype(jnp.float32)         # kernel stores h2 in bf16
    h = bn_relu(h, p["g2"], p["be2"])
    return jnp.dot(h.astype(bf), p["w3"].astype(bf),
                   preferred_element_type=jnp.float32) + p["b3"]


if __name__ == "__main__":
    key = jax.random.PRNGKey(0)
    k_feat, k_param = jax.random.split(key)

    # Small demo shapes; N deliberately not a multiple of the row tile so the
    # padded-row statistics correction path is exercised, and hidden_dim < 128
    # so the lane-padding path is exercised.
    N, INPUT_DIM, HIDDEN_DIM, OUTPUT_DIM = 200, 32, 64, 8
    ROW_TILE = 64  # -> 4 row tiles, last one partially padded

    feats = jax.random.normal(k_feat, (N, INPUT_DIM), jnp.float32)
    params = init_params(k_param, INPUT_DIM, HIDDEN_DIM, OUTPUT_DIM)

    out = logistic_regression_forward(feats, params, row_tile=ROW_TILE)
    out = jax.block_until_ready(out)

    ref = _reference_forward(feats, params)
    assert out.shape == (N, OUTPUT_DIM)
    max_err = float(jnp.max(jnp.abs(out - ref)))
    assert jnp.allclose(out, ref, atol=1e-2, rtol=1e-2), max_err

    print("KERNEL_OK")
</pallas_src>

<mosaic_0001>
module attributes {stable_mosaic.version = 11 : i64} {
  func.func @_linear_stats_kernel(%arg0: i32, %arg1: memref<64x32xbf16, #tpu.memory_space<vmem>>, %arg2: memref<32x128xbf16, #tpu.memory_space<vmem>>, %arg3: memref<1x128xf32, #tpu.memory_space<vmem>>, %arg4: memref<64x128xbf16, #tpu.memory_space<vmem>>, %arg5: memref<1x1x128xf32, #tpu.memory_space<vmem>>, %arg6: memref<1x1x128xf32, #tpu.memory_space<vmem>>) attributes {dimension_semantics = [#tpu.dimension_semantics<parallel>], iteration_bounds = array<i64: 4>, scalar_prefetch = 0 : i64, scratch_operands = 0 : i64, tpu.core_type = #tpu.core_type<tc>, window_params = [{transform_indices = @transform_0, window_bounds = array<i64: 64, 32>}, {pipeline_mode = #tpu.pipeline_mode<synchronous>, transform_indices = @transform_1, window_bounds = array<i64: 32, 128>}, {pipeline_mode = #tpu.pipeline_mode<synchronous>, transform_indices = @transform_2, window_bounds = array<i64: 1, 128>}, {transform_indices = @transform_3, window_bounds = array<i64: 64, 128>}, {transform_indices = @transform_4, window_bounds = array<i64: 1, 1, 128>}, {transform_indices = @transform_5, window_bounds = array<i64: 1, 1, 128>}]} {
    %c0 = arith.constant 0 : index
    %c0_0 = arith.constant 0 : index
    %0 = vector.load %arg1[%c0, %c0_0] : memref<64x32xbf16, #tpu.memory_space<vmem>>, vector<64x32xbf16>
    %c0_1 = arith.constant 0 : index
    %c0_2 = arith.constant 0 : index
    %1 = vector.load %arg2[%c0_1, %c0_2] : memref<32x128xbf16, #tpu.memory_space<vmem>>, vector<32x128xbf16>
    %cst = arith.constant dense<0.000000e+00> : vector<64x128xf32>
    %2 = tpu.matmul %0, %1, %cst {dimension_numbers = #tpu.dot_dimension_numbers<[1], [0], [0], [1], [0, 0, 1, 1], [], []>} : vector<64x32xbf16>, vector<32x128xbf16>, vector<64x128xf32> -> vector<64x128xf32>
    %c0_3 = arith.constant 0 : index
    %c0_4 = arith.constant 0 : index
    %3 = vector.load %arg3[%c0_3, %c0_4] : memref<1x128xf32, #tpu.memory_space<vmem>>, vector<1x128xf32>
    %4 = vector.broadcast %3 : vector<1x128xf32> to vector<64x128xf32>
    %5 = arith.addf %2, %4 : vector<64x128xf32>
    %6 = arith.truncf %5 : vector<64x128xf32> to vector<64x128xbf16>
    %c0_5 = arith.constant 0 : index
    %c0_6 = arith.constant 0 : index
    %7 = vector.load %arg4[%c0_5, %c0_6] : memref<64x128xbf16, #tpu.memory_space<vmem>>, vector<64x128xbf16>
    tpu.vector_store %arg4[%c0_5, %c0_6], %6 {strides = array<i32>} : memref<64x128xbf16, #tpu.memory_space<vmem>>, vector<64x128xbf16>,
    %8 = arith.extf %6 : vector<64x128xbf16> to vector<64x128xf32>
    %cst_7 = arith.constant dense<0.000000e+00> : vector<128xf32>
    %9 = vector.multi_reduction <add>, %8, %cst_7 [0] : vector<64x128xf32> to vector<128xf32>
    %10 = vector.shape_cast %9 : vector<128xf32> to vector<1x128xf32>
    %11 = vector.shape_cast %10 : vector<1x128xf32> to vector<1x1x128xf32>
    %c0_8 = arith.constant 0 : index
    %c0_9 = arith.constant 0 : index
    %c0_10 = arith.constant 0 : index
    %12 = vector.load %arg5[%c0_8, %c0_9, %c0_10] : memref<1x1x128xf32, #tpu.memory_space<vmem>>, vector<1x1x128xf32>
    tpu.vector_store %arg5[%c0_8, %c0_9, %c0_10], %11 {strides = array<i32>} : memref<1x1x128xf32, #tpu.memory_space<vmem>>, vector<1x1x128xf32>,
    %13 = arith.mulf %8, %8 : vector<64x128xf32>
    %cst_11 = arith.constant dense<0.000000e+00> : vector<128xf32>
    %14 = vector.multi_reduction <add>, %13, %cst_11 [0] : vector<64x128xf32> to vector<128xf32>
    %15 = vector.shape_cast %14 : vector<128xf32> to vector<1x128xf32>
    %16 = vector.shape_cast %15 : vector<1x128xf32> to vector<1x1x128xf32>
    %c0_12 = arith.constant 0 : index
    %c0_13 = arith.constant 0 : index
    %c0_14 = arith.constant 0 : index
    %17 = vector.load %arg6[%c0_12, %c0_13, %c0_14] : memref<1x1x128xf32, #tpu.memory_space<vmem>>, vector<1x1x128xf32>
    tpu.vector_store %arg6[%c0_12, %c0_13, %c0_14], %16 {strides = array<i32>} : memref<1x1x128xf32, #tpu.memory_space<vmem>>, vector<1x1x128xf32>,
    return
  }
  func.func @transform_0(%arg0: i32) -> (i32, i32) {
    %c0_i32 = arith.constant 0 : i32
    %c0_i32_0 = arith.constant 0 : i32
    return %arg0, %c0_i32 : i32, i32
  }
  func.func @transform_1(%arg0: i32) -> (i32, i32) {
    %c0_i32 = arith.constant 0 : i32
    %c0_i32_0 = arith.constant 0 : i32
    %c0_i32_1 = arith.constant 0 : i32
    return %c0_i32, %c0_i32_0 : i32, i32
  }
  func.func @transform_2(%arg0: i32) -> (i32, i32) {
    %c0_i32 = arith.constant 0 : i32
    %c0_i32_0 = arith.constant 0 : i32
    %c0_i32_1 = arith.constant 0 : i32
    return %c0_i32, %c0_i32_0 : i32, i32
  }
  func.func @transform_3(%arg0: i32) -> (i32, i32) {
    %c0_i32 = arith.constant 0 : i32
    %c0_i32_0 = arith.constant 0 : i32
    return %arg0, %c0_i32 : i32, i32
  }
  func.func @transform_4(%arg0: i32) -> (i32, i32, i32) {
    %c0_i32 = arith.constant 0 : i32
    %c0_i32_0 = arith.constant 0 : i32
    %c0_i32_1 = arith.constant 0 : i32
    return %arg0, %c0_i32, %c0_i32_0 : i32, i32, i32
  }
  func.func @transform_5(%arg0: i32) -> (i32, i32, i32) {
    %c0_i32 = arith.constant 0 : i32
    %c0_i32_0 = arith.constant 0 : i32
    %c0_i32_1 = arith.constant 0 : i32
    return %arg0, %c0_i32, %c0_i32_0 : i32, i32, i32
  }
}

module attributes {stable_mosaic.version = 11 : i64} {
  func.func @_bn_relu_linear_stats_kernel(%arg0: i32, %arg1: memref<64x128xbf16, #tpu.memory_space<vmem>>, %arg2: memref<1x128xf32, #tpu.memory_space<vmem>>, %arg3: memref<1x128xf32, #tpu.memory_space<vmem>>, %arg4: memref<128x128xbf16, #tpu.memory_space<vmem>>, %arg5: memref<1x128xf32, #tpu.memory_space<vmem>>, %arg6: memref<64x128xbf16, #tpu.memory_space<vmem>>, %arg7: memref<1x1x128xf32, #tpu.memory_space<vmem>>, %arg8: memref<1x1x128xf32, #tpu.memory_space<vmem>>) attributes {dimension_semantics = [#tpu.dimension_semantics<parallel>], iteration_bounds = array<i64: 4>, scalar_prefetch = 0 : i64, scratch_operands = 0 : i64, tpu.core_type = #tpu.core_type<tc>, window_params = [{transform_indices = @transform_0, window_bounds = array<i64: 64, 128>}, {pipeline_mode = #tpu.pipeline_mode<synchronous>, transform_indices = @transform_1, window_bounds = array<i64: 1, 128>}, {pipeline_mode = #tpu.pipeline_mode<synchronous>, transform_indices = @transform_2, window_bounds = array<i64: 1, 128>}, {pipeline_mode = #tpu.pipeline_mode<synchronous>, transform_indices = @transform_3, window_bounds = array<i64: 128, 128>}, {pipeline_mode = #tpu.pipeline_mode<synchronous>, transform_indices = @transform_4, window_bounds = array<i64: 1, 128>}, {transform_indices = @transform_5, window_bounds = array<i64: 64, 128>}, {transform_indices = @transform_6, window_bounds = array<i64: 1, 1, 128>}, {transform_indices = @transform_7, window_bounds = array<i64: 1, 1, 128>}]} {
    %c0 = arith.constant 0 : index
    %c0_0 = arith.constant 0 : index
    %0 = vector.load %arg1[%c0, %c0_0] : memref<64x128xbf16, #tpu.memory_space<vmem>>, vector<64x128xbf16>
    %1 = arith.extf %0 : vector<64x128xbf16> to vector<64x128xf32>
    %c0_1 = arith.constant 0 : index
    %c0_2 = arith.constant 0 : index
    %2 = vector.load %arg2[%c0_1, %c0_2] : memref<1x128xf32, #tpu.memory_space<vmem>>, vector<1x128xf32>
    %3 = vector.broadcast %2 : vector<1x128xf32> to vector<64x128xf32>
    %4 = arith.mulf %1, %3 : vector<64x128xf32>
    %c0_3 = arith.constant 0 : index
    %c0_4 = arith.constant 0 : index
    %5 = vector.load %arg3[%c0_3, %c0_4] : memref<1x128xf32, #tpu.memory_space<vmem>>, vector<1x128xf32>
    %6 = vector.broadcast %5 : vector<1x128xf32> to vector<64x128xf32>
    %7 = arith.addf %4, %6 : vector<64x128xf32>
    %cst = arith.constant 0.000000e+00 : f32
    %8 = vector.broadcast %cst : f32 to vector<64x128xf32>
    %9 = arith.maximumf %7, %8 : vector<64x128xf32>
    %10 = arith.truncf %9 : vector<64x128xf32> to vector<64x128xbf16>
    %c0_5 = arith.constant 0 : index
    %c0_6 = arith.constant 0 : index
    %11 = vector.load %arg4[%c0_5, %c0_6] : memref<128x128xbf16, #tpu.memory_space<vmem>>, vector<128x128xbf16>
    %cst_7 = arith.constant dense<0.000000e+00> : vector<64x128xf32>
    %12 = tpu.matmul %10, %11, %cst_7 {dimension_numbers = #tpu.dot_dimension_numbers<[1], [0], [0], [1], [0, 0, 1, 1], [], []>} : vector<64x128xbf16>, vector<128x128xbf16>, vector<64x128xf32> -> vector<64x128xf32>
    %c0_8 = arith.constant 0 : index
    %c0_9 = arith.constant 0 : index
    %13 = vector.load %arg5[%c0_8, %c0_9] : memref<1x128xf32, #tpu.memory_space<vmem>>, vector<1x128xf32>
    %14 = vector.broadcast %13 : vector<1x128xf32> to vector<64x128xf32>
    %15 = arith.addf %12, %14 : vector<64x128xf32>
    %16 = arith.truncf %15 : vector<64x128xf32> to vector<64x128xbf16>
    %c0_10 = arith.constant 0 : index
    %c0_11 = arith.constant 0 : index
    %17 = vector.load %arg6[%c0_10, %c0_11] : memref<64x128xbf16, #tpu.memory_space<vmem>>, vector<64x128xbf16>
    tpu.vector_store %arg6[%c0_10, %c0_11], %16 {strides = array<i32>} : memref<64x128xbf16, #tpu.memory_space<vmem>>, vector<64x128xbf16>,
    %18 = arith.extf %16 : vector<64x128xbf16> to vector<64x128xf32>
    %cst_12 = arith.constant dense<0.000000e+00> : vector<128xf32>
    %19 = vector.multi_reduction <add>, %18, %cst_12 [0] : vector<64x128xf32> to vector<128xf32>
    %20 = vector.shape_cast %19 : vector<128xf32> to vector<1x128xf32>
    %21 = vector.shape_cast %20 : vector<1x128xf32> to vector<1x1x128xf32>
    %c0_13 = arith.constant 0 : index
    %c0_14 = arith.constant 0 : index
    %c0_15 = arith.constant 0 : index
    %22 = vector.load %arg7[%c0_13, %c0_14, %c0_15] : memref<1x1x128xf32, #tpu.memory_space<vmem>>, vector<1x1x128xf32>
    tpu.vector_store %arg7[%c0_13, %c0_14, %c0_15], %21 {strides = array<i32>} : memref<1x1x128xf32, #tpu.memory_space<vmem>>, vector<1x1x128xf32>,
    %23 = arith.mulf %18, %18 : vector<64x128xf32>
    %cst_16 = arith.constant dense<0.000000e+00> : vector<128xf32>
    %24 = vector.multi_reduction <add>, %23, %cst_16 [0] : vector<64x128xf32> to vector<128xf32>
    %25 = vector.shape_cast %24 : vector<128xf32> to vector<1x128xf32>
    %26 = vector.shape_cast %25 : vector<1x128xf32> to vector<1x1x128xf32>
    %c0_17 = arith.constant 0 : index
    %c0_18 = arith.constant 0 : index
    %c0_19 = arith.constant 0 : index
    %27 = vector.load %arg8[%c0_17, %c0_18, %c0_19] : memref<1x1x128xf32, #tpu.memory_space<vmem>>, vector<1x1x128xf32>
    tpu.vector_store %arg8[%c0_17, %c0_18, %c0_19], %26 {strides = array<i32>} : memref<1x1x128xf32, #tpu.memory_space<vmem>>, vector<1x1x128xf32>,
    return
  }
  func.func @transform_0(%arg0: i32) -> (i32, i32) {
    %c0_i32 = arith.constant 0 : i32
    %c0_i32_0 = arith.constant 0 : i32
    return %arg0, %c0_i32 : i32, i32
  }
  func.func @transform_1(%arg0: i32) -> (i32, i32) {
    %c0_i32 = arith.constant 0 : i32
    %c0_i32_0 = arith.constant 0 : i32
    %c0_i32_1 = arith.constant 0 : i32
    return %c0_i32, %c0_i32_0 : i32, i32
  }
  func.func @transform_2(%arg0: i32) -> (i32, i32) {
    %c0_i32 = arith.constant 0 : i32
    %c0_i32_0 = arith.constant 0 : i32
    %c0_i32_1 = arith.constant 0 : i32
    return %c0_i32, %c0_i32_0 : i32, i32
  }
  func.func @transform_3(%arg0: i32) -> (i32, i32) {
    %c0_i32 = arith.constant 0 : i32
    %c0_i32_0 = arith.constant 0 : i32
    %c0_i32_1 = arith.constant 0 : i32
    return %c0_i32, %c0_i32_0 : i32, i32
  }
  func.func @transform_4(%arg0: i32) -> (i32, i32) {
    %c0_i32 = arith.constant 0 : i32
    %c0_i32_0 = arith.constant 0 : i32
    %c0_i32_1 = arith.constant 0 : i32
    return %c0_i32, %c0_i32_0 : i32, i32
  }
  func.func @transform_5(%arg0: i32) -> (i32, i32) {
    %c0_i32 = arith.constant 0 : i32
    %c0_i32_0 = arith.constant 0 : i32
    return %arg0, %c0_i32 : i32, i32
  }
  func.func @transform_6(%arg0: i32) -> (i32, i32, i32) {
    %c0_i32 = arith.constant 0 : i32
    %c0_i32_0 = arith.constant 0 : i32
    %c0_i32_1 = arith.constant 0 : i32
    return %arg0, %c0_i32, %c0_i32_0 : i32, i32, i32
  }
  func.func @transform_7(%arg0: i32) -> (i32, i32, i32) {
    %c0_i32 = arith.constant 0 : i32
    %c0_i32_0 = arith.constant 0 : i32
    %c0_i32_1 = arith.constant 0 : i32
    return %arg0, %c0_i32, %c0_i32_0 : i32, i32, i32
  }
}

module attributes {stable_mosaic.version = 11 : i64} {
  func.func @_bn_relu_linear_out_kernel(%arg0: i32, %arg1: memref<64x128xbf16, #tpu.memory_space<vmem>>, %arg2: memref<1x128xf32, #tpu.memory_space<vmem>>, %arg3: memref<1x128xf32, #tpu.memory_space<vmem>>, %arg4: memref<128x128xbf16, #tpu.memory_space<vmem>>, %arg5: memref<1x128xf32, #tpu.memory_space<vmem>>, %arg6: memref<64x128xf32, #tpu.memory_space<vmem>>) attributes {dimension_semantics = [#tpu.dimension_semantics<parallel>], iteration_bounds = array<i64: 4>, scalar_prefetch = 0 : i64, scratch_operands = 0 : i64, tpu.core_type = #tpu.core_type<tc>, window_params = [{transform_indices = @transform_0, window_bounds = array<i64: 64, 128>}, {pipeline_mode = #tpu.pipeline_mode<synchronous>, transform_indices = @transform_1, window_bounds = array<i64: 1, 128>}, {pipeline_mode = #tpu.pipeline_mode<synchronous>, transform_indices = @transform_2, window_bounds = array<i64: 1, 128>}, {pipeline_mode = #tpu.pipeline_mode<synchronous>, transform_indices = @transform_3, window_bounds = array<i64: 128, 128>}, {pipeline_mode = #tpu.pipeline_mode<synchronous>, transform_indices = @transform_4, window_bounds = array<i64: 1, 128>}, {transform_indices = @transform_5, window_bounds = array<i64: 64, 128>}]} {
    %c0 = arith.constant 0 : index
    %c0_0 = arith.constant 0 : index
    %0 = vector.load %arg1[%c0, %c0_0] : memref<64x128xbf16, #tpu.memory_space<vmem>>, vector<64x128xbf16>
    %1 = arith.extf %0 : vector<64x128xbf16> to vector<64x128xf32>
    %c0_1 = arith.constant 0 : index
    %c0_2 = arith.constant 0 : index
    %2 = vector.load %arg2[%c0_1, %c0_2] : memref<1x128xf32, #tpu.memory_space<vmem>>, vector<1x128xf32>
    %3 = vector.broadcast %2 : vector<1x128xf32> to vector<64x128xf32>
    %4 = arith.mulf %1, %3 : vector<64x128xf32>
    %c0_3 = arith.constant 0 : index
    %c0_4 = arith.constant 0 : index
    %5 = vector.load %arg3[%c0_3, %c0_4] : memref<1x128xf32, #tpu.memory_space<vmem>>, vector<1x128xf32>
    %6 = vector.broadcast %5 : vector<1x128xf32> to vector<64x128xf32>
    %7 = arith.addf %4, %6 : vector<64x128xf32>
    %cst = arith.constant 0.000000e+00 : f32
    %8 = vector.broadcast %cst : f32 to vector<64x128xf32>
    %9 = arith.maximumf %7, %8 : vector<64x128xf32>
    %10 = arith.truncf %9 : vector<64x128xf32> to vector<64x128xbf16>
    %c0_5 = arith.constant 0 : index
    %c0_6 = arith.constant 0 : index
    %11 = vector.load %arg4[%c0_5, %c0_6] : memref<128x128xbf16, #tpu.memory_space<vmem>>, vector<128x128xbf16>
    %cst_7 = arith.constant dense<0.000000e+00> : vector<64x128xf32>
    %12 = tpu.matmul %10, %11, %cst_7 {dimension_numbers = #tpu.dot_dimension_numbers<[1], [0], [0], [1], [0, 0, 1, 1], [], []>} : vector<64x128xbf16>, vector<128x128xbf16>, vector<64x128xf32> -> vector<64x128xf32>
    %c0_8 = arith.constant 0 : index
    %c0_9 = arith.constant 0 : index
    %13 = vector.load %arg5[%c0_8, %c0_9] : memref<1x128xf32, #tpu.memory_space<vmem>>, vector<1x128xf32>
    %14 = vector.broadcast %13 : vector<1x128xf32> to vector<64x128xf32>
    %15 = arith.addf %12, %14 : vector<64x128xf32>
    %c0_10 = arith.constant 0 : index
    %c0_11 = arith.constant 0 : index
    %16 = vector.load %arg6[%c0_10, %c0_11] : memref<64x128xf32, #tpu.memory_space<vmem>>, vector<64x128xf32>
    tpu.vector_store %arg6[%c0_10, %c0_11], %15 {strides = array<i32>} : memref<64x128xf32, #tpu.memory_space<vmem>>, vector<64x128xf32>,
    return
  }
  func.func @transform_0(%arg0: i32) -> (i32, i32) {
    %c0_i32 = arith.constant 0 : i32
    %c0_i32_0 = arith.constant 0 : i32
    return %arg0, %c0_i32 : i32, i32
  }
  func.func @transform_1(%arg0: i32) -> (i32, i32) {
    %c0_i32 = arith.constant 0 : i32
    %c0_i32_0 = arith.constant 0 : i32
    %c0_i32_1 = arith.constant 0 : i32
    return %c0_i32, %c0_i32_0 : i32, i32
  }
  func.func @transform_2(%arg0: i32) -> (i32, i32) {
    %c0_i32 = arith.constant 0 : i32
    %c0_i32_0 = arith.constant 0 : i32
    %c0_i32_1 = arith.constant 0 : i32
    return %c0_i32, %c0_i32_0 : i32, i32
  }
  func.func @transform_3(%arg0: i32) -> (i32, i32) {
    %c0_i32 = arith.constant 0 : i32
    %c0_i32_0 = arith.constant 0 : i32
    %c0_i32_1 = arith.constant 0 : i32
    return %c0_i32, %c0_i32_0 : i32, i32
  }
  func.func @transform_4(%arg0: i32) -> (i32, i32) {
    %c0_i32 = arith.constant 0 : i32
    %c0_i32_0 = arith.constant 0 : i32
    %c0_i32_1 = arith.constant 0 : i32
    return %c0_i32, %c0_i32_0 : i32, i32
  }
  func.func @transform_5(%arg0: i32) -> (i32, i32) {
    %c0_i32 = arith.constant 0 : i32
    %c0_i32_0 = arith.constant 0 : i32
    return %arg0, %c0_i32 : i32, i32
  }
}

</mosaic_0001>

<llo_original>
// kernel: logistic_regression_forward.5
$region0: #{logistic_regression_forward.5}
  #allocation0 [shape = 'u32[]', space=smem, size = 0x4, offset = 0x4, fixed_abs, tag = 'smem constant byte address 0x4 - core index']
  #allocation1 [shape = 'u32[144,128]{1,0:T(1,128)}', space=vmem, size = 0x12000, scoped, tag = 'internal scratch']
  %s0 = inlined_call_operand.vmem [shape: bf16[256,128], index: 0, kind: input, shape index: {}]
  %s1 = inlined_call_operand.vmem [shape: f32[1,128], index: 1, kind: input, shape index: {}]
  %s2 = inlined_call_operand.vmem [shape: f32[1,128], index: 2, kind: input, shape index: {}]
  %s3 = inlined_call_operand.vmem [shape: bf16[128,128], index: 3, kind: input, shape index: {}]
  %s4 = inlined_call_operand.vmem [shape: f32[1,128], index: 4, kind: input, shape index: {}]
  %s5 = inlined_call_operand.vmem [shape: f32[256,128], index: 5, kind: output, shape index: {}]
  %s6 = sld [smem:[#allocation0]]
  $region53: #{logistic_regression_forward.5} parent=0
    _
  %s8 = ssub.s32 1, %s6
  %s9 = scalar_select 0, %s8, %s6
  loop: start=0, step=1, limit=6
  $region2: #{logistic_regression_forward.5} parent=0 // loop_pre_header
    _
  $region3: #{logistic_regression_forward.5} parent=0 // loop_header
    %s11 = sphi 0, %s15
    %p12 = scmp.ge.s32.totalorder %s11, 6
    %s21 = sphi 0, %s23
    %s24 = sphi 0, %s21
    %s25 = sphi 0, %s24
    %s41 = sphi 0, %s25
    %s45 = sphi 0, %s45
    %s47 = sphi 0, %s45
    %s48 = sphi 0, %s47
    %s62 = sphi 0, %s48
    %s66 = sphi 0, %s66
    %s68 = sphi 0, %s66
    %s69 = sphi 0, %s68
    %s83 = sphi 0, %s69
    %s87 = sphi 0, %s87
    %s89 = sphi 0, %s87
    %s90 = sphi 0, %s89
    %s104 = sphi 0, %s90
    %s108 = sphi 0, %s108
    %s110 = sphi 0, %s108
    %s111 = sphi 0, %s110
    %s125 = sphi 0, %s111
    %s131 = sphi 0, %s133
    %s134 = sphi 0, %s131
    %s135 = sphi 0, %s134
    %s151 = sphi 0, %s135
  $region4: #{logistic_regression_forward.5} parent=0 // loop_header_branch
    %14 = sbr.rel (%p12) target = $region8
  $region5: #{logistic_regression_forward.5} parent=0 // loop_body
    %s16 = ssub.s32 %s11, 1
    %s17 = ssub.s32 %s11, 2
    %s18 = sadd.s32 %s11, 1
    %s19 = ssub.s32 %s11, %s18
    %p20 = scmp.eq.s32.totalorder %s19, 0
    %s22 = sadd.s32 %s21, 1
    %s23 = scalar_select %p20, %s21, %s22
    %p26 = pneg %p20
    %p27 = scmp.eq.s32.totalorder %s11, 3
    %p28 = por %p26, %p27
    %p29 = scmp.ne.s32.totalorder %s21, %s24
    %p30 = scmp.eq.s32.totalorder %s11, 0
    %p31 = por %p29, %p30
    %p32 = scmp.ne.s32.totalorder %s21, %s24
    %p33 = scmp.eq.s32.totalorder %s16, 3
    %p34 = por %p32, %p33
    %p35 = scmp.ne.s32.totalorder %s24, %s25
    %p36 = scmp.eq.s32.totalorder %s16, 0
    %p37 = por %p35, %p36
    %p38 = scmp.ne.s32.totalorder %s24, %s25
    %p39 = scmp.eq.s32.totalorder %s17, 3
    %p40 = por %p38, %p39
    %p42 = scmp.ne.s32.totalorder %s25, %s41
    %p43 = scmp.eq.s32.totalorder %s17, 0
    %p44 = por %p42, %p43
    %s46 = sadd.s32 %s45, 1
    %p49 = scmp.eq.s32.totalorder %s11, 3
    %p50 = scmp.ne.s32.totalorder %s45, %s47
    %p51 = scmp.eq.s32.totalorder %s11, 0
    %p52 = por %p50, %p51
    %p53 = scmp.ne.s32.totalorder %s45, %s47
    %p54 = scmp.eq.s32.totalorder %s16, 3
    %p55 = por %p53, %p54
    %p56 = scmp.ne.s32.totalorder %s47, %s48
    %p57 = scmp.eq.s32.totalorder %s16, 0
    %p58 = por %p56, %p57
    %p59 = scmp.ne.s32.totalorder %s47, %s48
    %p60 = scmp.eq.s32.totalorder %s17, 3
    %p61 = por %p59, %p60
    %p63 = scmp.ne.s32.totalorder %s48, %s62
    %p64 = scmp.eq.s32.totalorder %s17, 0
    %p65 = por %p63, %p64
    %s67 = sadd.s32 %s66, 1
    %p70 = scmp.eq.s32.totalorder %s11, 3
    %p71 = scmp.ne.s32.totalorder %s66, %s68
    %p72 = scmp.eq.s32.totalorder %s11, 0
    %p73 = por %p71, %p72
    %p74 = scmp.ne.s32.totalorder %s66, %s68
    %p75 = scmp.eq.s32.totalorder %s16, 3
    %p76 = por %p74, %p75
    %p77 = scmp.ne.s32.totalorder %s68, %s69
    %p78 = scmp.eq.s32.totalorder %s16, 0
    %p79 = por %p77, %p78
    %p80 = scmp.ne.s32.totalorder %s68, %s69
    %p81 = scmp.eq.s32.totalorder %s17, 3
    %p82 = por %p80, %p81
    %p84 = scmp.ne.s32.totalorder %s69, %s83
    %p85 = scmp.eq.s32.totalorder %s17, 0
    %p86 = por %p84, %p85
    %s88 = sadd.s32 %s87, 1
    %p91 = scmp.eq.s32.totalorder %s11, 3
    %p92 = scmp.ne.s32.totalorder %s87, %s89
    %p93 = scmp.eq.s32.totalorder %s11, 0
    %p94 = por %p92, %p93
    %p95 = scmp.ne.s32.totalorder %s87, %s89
    %p96 = scmp.eq.s32.totalorder %s16, 3
    %p97 = por %p95, %p96
    %p98 = scmp.ne.s32.totalorder %s89, %s90
    %p99 = scmp.eq.s32.totalorder %s16, 0
    %p100 = por %p98, %p99
    %p101 = scmp.ne.s32.totalorder %s89, %s90
    %p102 = scmp.eq.s32.totalorder %s17, 3
    %p103 = por %p101, %p102
    %p105 = scmp.ne.s32.totalorder %s90, %s104
    %p106 = scmp.eq.s32.totalorder %s17, 0
    %p107 = por %p105, %p106
    %s109 = sadd.s32 %s108, 1
    %p112 = scmp.eq.s32.totalorder %s11, 3
    %p113 = scmp.ne.s32.totalorder %s108, %s110
    %p114 = scmp.eq.s32.totalorder %s11, 0
    %p115 = por %p113, %p114
    %p116 = scmp.ne.s32.totalorder %s108, %s110
    %p117 = scmp.eq.s32.totalorder %s16, 3
    %p118 = por %p116, %p117
    %p119 = scmp.ne.s32.totalorder %s110, %s111
    %p120 = scmp.eq.s32.totalorder %s16, 0
    %p121 = por %p119, %p120
    %p122 = scmp.ne.s32.totalorder %s110, %s111
    %p123 = scmp.eq.s32.totalorder %s17, 3
    %p124 = por %p122, %p123
    %p126 = scmp.ne.s32.totalorder %s111, %s125
    %p127 = scmp.eq.s32.totalorder %s17, 0
    %p128 = por %p126, %p127
    %s129 = ssub.s32 %s11, %s18
    %p130 = scmp.eq.s32.totalorder %s129, 0
    %s132 = sadd.s32 %s131, 1
    %s133 = scalar_select %p130, %s131, %s132
    %p136 = pneg %p130
    %p137 = scmp.eq.s32.totalorder %s11, 3
    %p138 = por %p136, %p137
    %p139 = scmp.ne.s32.totalorder %s131, %s134
    %p140 = scmp.eq.s32.totalorder %s11, 0
    %p141 = por %p139, %p140
    %p142 = scmp.ne.s32.totalorder %s131, %s134
    %p143 = scmp.eq.s32.totalorder %s16, 3
    %p144 = por %p142, %p143
    %p145 = scmp.ne.s32.totalorder %s134, %s135
    %p146 = scmp.eq.s32.totalorder %s16, 0
    %p147 = por %p145, %p146
    %p148 = scmp.ne.s32.totalorder %s134, %s135
    %p149 = scmp.eq.s32.totalorder %s17, 3
    %p150 = por %p148, %p149
    %p152 = scmp.ne.s32.totalorder %s135, %s151
    %p153 = scmp.eq.s32.totalorder %s17, 0
    %p154 = por %p152, %p153
    %p155 = scmp.le.s32.totalorder 1, %s11
    %p156 = scmp.lt.s32.totalorder %s11, 5
    %p157 = pnand %p155, %p156
    %p158 = pneg %p157
    // Predicated region
    $region9: #{logistic_regression_forward.5} parent=5 // pred_check
      _
    $region10: #{logistic_regression_forward.5} parent=5 // pred_check_branch
      %160 = sbr.rel (%p157) target = $region12
    $region11: #{logistic_regression_forward.5} parent=5 // pred_region
      %s161 = ssub.s32 %s11, 1
      // Predicated region
      $region13: #{logistic_regression_forward.5} parent=11 // pred_check
        %p162 = pneg %p58
      $region14: #{logistic_regression_forward.5} parent=11 // pred_check_branch
        %164 = sbr.rel (%p162) target = $region16
      $region15: #{logistic_regression_forward.5} parent=11 // pred_region
        _
      $region16: #{logistic_regression_forward.5} parent=11 // pred_fallthru
        _
      // Predicated region
      $region17: #{logistic_regression_forward.5} parent=11 // pred_check
        %p165 = pneg %p79
      $region18: #{logistic_regression_forward.5} parent=11 // pred_check_branch
        %167 = sbr.rel (%p165) target = $region20
      $region19: #{logistic_regression_forward.5} parent=11 // pred_region
        _
      $region20: #{logistic_regression_forward.5} parent=11 // pred_fallthru
        _
      // Predicated region
      $region21: #{logistic_regression_forward.5} parent=11 // pred_check
        %p168 = pneg %p100
      $region22: #{logistic_regression_forward.5} parent=11 // pred_check_branch
        %170 = sbr.rel (%p168) target = $region24
      $region23: #{logistic_regression_forward.5} parent=11 // pred_region
        _
      $region24: #{logistic_regression_forward.5} parent=11 // pred_fallthru
        _
      // Predicated region
      $region25: #{logistic_regression_forward.5} parent=11 // pred_check
        %p171 = pneg %p121
      $region26: #{logistic_regression_forward.5} parent=11 // pred_check_branch
        %173 = sbr.rel (%p171) target = $region28
      $region27: #{logistic_regression_forward.5} parent=11 // pred_region
        _
      $region28: #{logistic_regression_forward.5} parent=11 // pred_fallthru
        _
    $region12: #{logistic_regression_forward.5} parent=5 // pred_fallthru
      _
    %p174 = scmp.lt.s32.totalorder %s11, 4
    // Predicated region
    $region29: #{logistic_regression_forward.5} parent=5 // pred_check
      %p175 = pneg %p174
    $region30: #{logistic_regression_forward.5} parent=5 // pred_check_branch
      %177 = sbr.rel (%p175) target = $region32
    $region31: #{logistic_regression_forward.5} parent=5 // pred_region
      // Predicated region
      $region33: #{logistic_regression_forward.5} parent=31 // pred_check
        %p178 = pneg %p31
      $region34: #{logistic_regression_forward.5} parent=31 // pred_check_branch
        %180 = sbr.rel (%p178) target = $region36
      $region35: #{logistic_regression_forward.5} parent=31 // pred_region
        %s181 = smul.u32 8, %s11
        %p182 = scmp.lt.s32.totalorder %s181, 31
        %s183 = scalar_select %p182, %s181, 31
        %s184 = smul.addr %s183, 4
        %s185 = scalar_lea.vmem %s0, %s184
        %s186 = smul.u32 8, %s11
      $region36: #{logistic_regression_forward.5} parent=31 // pred_fallthru
        _
    $region32: #{logistic_regression_forward.5} parent=5 // pred_fallthru
      _
    %p187 = scmp.le.s32.totalorder 1, %s11
    %p188 = scmp.lt.s32.totalorder %s11, 5
    %p189 = pnand %p187, %p188
    %p190 = pneg %p189
    // Predicated region
    $region37: #{logistic_regression_forward.5} parent=5 // pred_check
      _
    $region38: #{logistic_regression_forward.5} parent=5 // pred_check_branch
      %192 = sbr.rel (%p189) target = $region40
    $region39: #{logistic_regression_forward.5} parent=5 // pred_region
      %s193 = ssub.s32 %s11, 1
      %s194 = smul.u32 8, %s16
      %p195 = scmp.lt.s32.totalorder %s194, 31
      %s196 = scalar_select %p195, %s194, 31
      %s197 = smul.addr %s196, 4
      %s198 = scalar_lea.vmem %s0, %s197
      %p199 = pneg %p37
      %p200 = pneg %p34
      %p201 = pneg %p58
      %p202 = pneg %p55
      %p203 = pneg %p79
      %p204 = pneg %p76
      %p205 = pneg %p100
      %p206 = pneg %p97
      %p207 = pneg %p121
      %p208 = pneg %p118
      %p209 = pneg %p147
      %p210 = pneg %p144
      %s211 = smul.u32 8, %s16
      %p212 = scmp.lt.s32.totalorder %s211, 31
      %s213 = scalar_select %p212, %s211, 31
      %s214 = smul.addr %s213, 8
      %s215 = scalar_lea.vmem %s5, %s214
      %s216 = smul.u32 8, %s16
      %p217 = scmp.lt.s32.totalorder %s216, 31
      %s218 = scalar_select %p217, %s216, 31
      %s219 = smul.addr %s218, 4
      %s220 = scalar_lea.vmem %s0, %s219
      %s221 = smul.u32 8, %s16
      %s222 = smul.u32 8, %s16
      %p223 = scmp.lt.s32.totalorder %s222, 31
      %s224 = scalar_select %p223, %s222, 31
      %s225 = smul.addr %s224, 8
      %s226 = scalar_lea.vmem %s5, %s225
      %s227 = smul.u32 8, %s16
      %v229 = vld [vmem:[%s220] sm:$0xf]
      %v230 = vld [vmem:[%s220 + $0x4] sm:$0xf]
      %v231 = vld [vmem:[%s220 + $0x8] sm:$0xf]
      %v232 = vld [vmem:[%s220 + $0xc] sm:$0xf]
      %v233 = vld [vmem:[%s220 + $0x10] sm:$0xf]
      %v234 = vld [vmem:[%s220 + $0x14] sm:$0xf]
      %v235 = vld [vmem:[%s220 + $0x18] sm:$0xf]
      %v236 = vld [vmem:[%s220 + $0x1c] sm:$0xf]
      %v237 = vunpack.c.l.bf16 %v229
      %v238 = vunpack.c.l.bf16 %v230
      %v239 = vunpack.c.l.bf16 %v231
      %v240 = vunpack.c.l.bf16 %v232
      %v241 = vunpack.c.l.bf16 %v233
      %v242 = vunpack.c.l.bf16 %v234
      %v243 = vunpack.c.l.bf16 %v235
      %v244 = vunpack.c.l.bf16 %v236
      %v245 = vld [vmem:[%s1] sm:$0x1]
      %v247 = vlaneseq
      %v248 = vshrl.u32 %v247, 7
      %v249 = vsub.s32 0, %v248
      %v250 = vrot.slane %v245, %v249
      %v252 = vmul.f32 %v237, %v250
      %v253 = vmul.f32 %v238, %v250
      %v254 = vmul.f32 %v239, %v250
      %v255 = vmul.f32 %v240, %v250
      %v256 = vmul.f32 %v241, %v250
      %v257 = vmul.f32 %v242, %v250
      %v258 = vmul.f32 %v243, %v250
      %v259 = vmul.f32 %v244, %v250
      %v260 = vld [vmem:[%s2] sm:$0x1]
      %v262 = vlaneseq
      %v263 = vshrl.u32 %v262, 7
      %v264 = vsub.s32 0, %v263
      %v265 = vrot.slane %v260, %v264
      %v267 = vadd.f32 %v252, %v265
      %v268 = vadd.f32 %v253, %v265
      %v269 = vadd.f32 %v254, %v265
      %v270 = vadd.f32 %v255, %v265
      %v271 = vadd.f32 %v256, %v265
      %v272 = vadd.f32 %v257, %v265
      %v273 = vadd.f32 %v258, %v265
      %v274 = vadd.f32 %v259, %v265
      %v275 = vmax.f32 %v267, 0.0
      %v276 = vmax.f32 %v268, 0.0
      %v277 = vmax.f32 %v269, 0.0
      %v278 = vmax.f32 %v270, 0.0
      %v279 = vmax.f32 %v271, 0.0
      %v280 = vmax.f32 %v272, 0.0
      %v281 = vmax.f32 %v273, 0.0
      %v282 = vmax.f32 %v274, 0.0
      %v283 = vpack.c.bf16 %v276, %v275
      %v284 = vpack.c.bf16 %v278, %v277
      %v285 = vpack.c.bf16 %v280, %v279
      %v286 = vpack.c.bf16 %v282, %v281
      %v287 = vld [vmem:[%s3] sm:$0xf]
      %v288 = vld [vmem:[%s3 + $0x4] sm:$0xf]
      %v289 = vld [vmem:[%s3 + $0x8] sm:$0xf]
      %v290 = vld [vmem:[%s3 + $0xc] sm:$0xf]
      %v291 = vld [vmem:[%s3 + $0x10] sm:$0xf]
      %v292 = vld [vmem:[%s3 + $0x14] sm:$0xf]
      %v293 = vld [vmem:[%s3 + $0x18] sm:$0xf]
      %v294 = vld [vmem:[%s3 + $0x1c] sm:$0xf]
      %v295 = vld [vmem:[%s3 + $0x20] sm:$0xf]
      %v296 = vld [vmem:[%s3 + $0x24] sm:$0xf]
      %v297 = vld [vmem:[%s3 + $0x28] sm:$0xf]
      %v298 = vld [vmem:[%s3 + $0x2c] sm:$0xf]
      %v299 = vld [vmem:[%s3 + $0x30] sm:$0xf]
      %v300 = vld [vmem:[%s3 + $0x34] sm:$0xf]
      %v301 = vld [vmem:[%s3 + $0x38] sm:$0xf]
      %v302 = vld [vmem:[%s3 + $0x3c] sm:$0xf]
      %v303 = vld [vmem:[%s4] sm:$0x1]
      %v305 = vlaneseq
      %v306 = vshrl.u32 %v305, 7
      %v307 = vsub.s32 0, %v306
      %v308 = vrot.slane %v303, %v307
      %v326 = vunpack.c.l.b16 %v287
      %v327 = vunpack.c.l.b16 %v288
      %v328 = vunpack.c.l.b16 %v289
      %v329 = vunpack.c.l.b16 %v290
      %v330 = vunpack.c.l.b16 %v291
      %v331 = vunpack.c.l.b16 %v292
      %v332 = vunpack.c.l.b16 %v293
      %v333 = vunpack.c.l.b16 %v294
      %v334 = vunpack.c.l.b16 %v295
      %v335 = vunpack.c.l.b16 %v296
      %v336 = vunpack.c.l.b16 %v297
      %v337 = vunpack.c.l.b16 %v298
      %v338 = vunpack.c.l.b16 %v299
      %v339 = vunpack.c.l.b16 %v300
      %v340 = vunpack.c.l.b16 %v301
      %v341 = vunpack.c.l.b16 %v302
      %v342 = vpack.c.b16 %v327, %v326
      %v343 = vpack.c.b16 %v329, %v328
      %v344 = vpack.c.b16 %v331, %v330
      %v345 = vpack.c.b16 %v333, %v332
      %v346 = vpack.c.b16 %v335, %v334
      %v347 = vpack.c.b16 %v337, %v336
      %v348 = vpack.c.b16 %v339, %v338
      %v349 = vpack.c.b16 %v341, %v340
      %358 = vmatprep.subr.bf16.mxu0 0
      %359 = vmatpush1.bf16.msra.mxu0 %v349
      %360 = vmatprep.subr.bf16.mxu0 0
      %361 = vmatpush1.bf16.msra.mxu0 %v348
      %362 = vmatprep.subr.bf16.mxu0 0
      %363 = vmatpush1.bf16.msra.mxu0 %v347
      %364 = vmatprep.subr.bf16.mxu0 0
      %365 = vmatpush1.bf16.msra.mxu0 %v346
      %366 = vmatprep.subr.bf16.mxu0 0
      %367 = vmatpush1.bf16.msra.mxu0 %v345
      %368 = vmatprep.subr.bf16.mxu0 0
      %369 = vmatpush1.bf16.msra.mxu0 %v344
      %370 = vmatprep.subr.bf16.mxu0 0
      %371 = vmatpush1.bf16.msra.mxu0 %v343
      %372 = vmatprep.subr.bf16.mxu0 0
      %373 = vmatpush1.bf16.msra.mxu0 %v342
      %374 = vmatprep.subr.bf16.mxu0 0
      %375 = vmatpush2.bf16.msra.mxu0 0
      %376 = vmatprep.subr.bf16.mxu0 0
      %377 = vmatpush2.bf16.msra.mxu0 0
      %378 = vmatprep.subr.bf16.mxu0 0
      %379 = vmatpush2.bf16.msra.mxu0 0
      %380 = vmatprep.subr.bf16.mxu0 0
      %381 = vmatpush2.bf16.msra.mxu0 0
      %382 = vmatprep.subr.bf16.mxu0 0
      %383 = vmatpush2.bf16.msra.mxu0 0
      %384 = vmatprep.subr.bf16.mxu0 0
      %385 = vmatpush2.bf16.msra.mxu0 0
      %386 = vmatprep.subr.bf16.mxu0 0
      %387 = vmatpush2.bf16.msra.mxu0 0
      %388 = vmatprep.subr.bf16.mxu0 0
      %389 = vmatpush2.bf16.msra.mxu0 0
      %390 = vmatprep.mubr.bf16.mxu0 0
      %391 = vmatmul.mubr.bf16.gmra.mxu0 %v283
      %v392 = vpop.f32.mrf.mxu0
      %v393 = vadd.f32 %v308, %v392
      %v394 = vpop.f32.mrf.mxu0
      %v395 = vpop.f32.mrf.mxu0
      %v396 = vadd.f32 %v308, %v395
      %v397 = vpop.f32.mrf.mxu0
      %398 = vmatprep.mubr.bf16.mxu0 0
      %399 = vmatmul.mubr.bf16.gmra.mxu0 %v284
      %v400 = vpop.f32.mrf.mxu0
      %v401 = vadd.f32 %v308, %v400
      %v402 = vpop.f32.mrf.mxu0
      %v403 = vpop.f32.mrf.mxu0
      %v404 = vadd.f32 %v308, %v403
      %v405 = vpop.f32.mrf.mxu0
      %406 = vmatprep.mubr.bf16.mxu0 0
      %407 = vmatmul.mubr.bf16.gmra.mxu0 %v285
      %v408 = vpop.f32.mrf.mxu0
      %v409 = vadd.f32 %v308, %v408
      %v410 = vpop.f32.mrf.mxu0
      %v411 = vpop.f32.mrf.mxu0
      %v412 = vadd.f32 %v308, %v411
      %v413 = vpop.f32.mrf.mxu0
      %414 = vmatprep.mubr.bf16.mxu0 0
      %415 = vmatmul.mubr.bf16.gmra.mxu0 %v286
      %v416 = vpop.f32.mrf.mxu0
      %v417 = vadd.f32 %v308, %v416
      %v418 = vpop.f32.mrf.mxu0
      %v419 = vpop.f32.mrf.mxu0
      %v420 = vadd.f32 %v308, %v419
      %v421 = vpop.f32.mrf.mxu0
      %422 = vdwg.mxu0
      %423 = vst [vmem:[%s226] sm:$0xff] %v393
      %424 = vst [vmem:[%s226 + $0x8] sm:$0xff] %v396
      %425 = vst [vmem:[%s226 + $0x10] sm:$0xff] %v401
      %426 = vst [vmem:[%s226 + $0x18] sm:$0xff] %v404
      %427 = vst [vmem:[%s226 + $0x20] sm:$0xff] %v409
      %428 = vst [vmem:[%s226 + $0x28] sm:$0xff] %v412
      %429 = vst [vmem:[%s226 + $0x30] sm:$0xff] %v417
      %430 = vst [vmem:[%s226 + $0x38] sm:$0xff] %v420
      %s431 = smul.u32 8, %s16
      %p432 = scmp.lt.s32.totalorder %s431, 31
      %s433 = scalar_select %p432, %s431, 31
      %s434 = smul.addr %s433, 8
      %s435 = scalar_lea.vmem %s5, %s434
      // Predicated region
      $region41: #{logistic_regression_forward.5} parent=39 // pred_check
        %p436 = pneg %p144
      $region42: #{logistic_regression_forward.5} parent=39 // pred_check_branch
        %438 = sbr.rel (%p436) target = $region44
      $region43: #{logistic_regression_forward.5} parent=39 // pred_region
        %s439 = smul.u32 8, %s16
      $region44: #{logistic_regression_forward.5} parent=39 // pred_fallthru
        _
    $region40: #{logistic_regression_forward.5} parent=5 // pred_fallthru
      _
    %p440 = scmp.le.s32.totalorder 2, %s11
    // Predicated region
    $region45: #{logistic_regression_forward.5} parent=5 // pred_check
      %p441 = pneg %p440
    $region46: #{logistic_regression_forward.5} parent=5 // pred_check_branch
      %443 = sbr.rel (%p441) target = $region48
    $region47: #{logistic_regression_forward.5} parent=5 // pred_region
      %s444 = ssub.s32 %s11, 2
      // Predicated region
      $region49: #{logistic_regression_forward.5} parent=47 // pred_check
        %p445 = pneg %p150
      $region50: #{logistic_regression_forward.5} parent=47 // pred_check_branch
        %447 = sbr.rel (%p445) target = $region52
      $region51: #{logistic_regression_forward.5} parent=47 // pred_region
        %s448 = smul.u32 8, %s17
        %p449 = scmp.lt.s32.totalorder %s448, 31
        %s450 = scalar_select %p449, %s448, 31
        %s451 = smul.addr %s450, 8
        %s452 = scalar_lea.vmem %s5, %s451
      $region52: #{logistic_regression_forward.5} parent=47 // pred_fallthru
        _
    $region48: #{logistic_regression_forward.5} parent=5 // pred_fallthru
      _
  $region6: #{logistic_regression_forward.5} parent=0 // loop_footer
    %s15 = sadd.s32 1, %s11
  $region7: #{logistic_regression_forward.5} parent=0 // loop_footer_branch
    %10 = sbr.rel target = $region3
  $region8: #{logistic_regression_forward.5} parent=0 // loop_exit
    _

// kernel: logistic_regression_forward.3
$region0: #{logistic_regression_forward.3}
  #allocation0 [shape = 'u32[]', space=smem, size = 0x4, offset = 0x4, fixed_abs, tag = 'smem constant byte address 0x4 - core index']
  #allocation1 [shape = 'u32[144,128]{1,0:T(1,128)}', space=vmem, size = 0x12000, scoped, tag = 'internal scratch']
  %s0 = inlined_call_operand.vmem [shape: bf16[256,32], index: 0, kind: input, shape index: {}]
  %s1 = inlined_call_operand.vmem [shape: bf16[32,128], index: 1, kind: input, shape index: {}]
  %s2 = inlined_call_operand.vmem [shape: f32[1,128], index: 2, kind: input, shape index: {}]
  %s3 = inlined_call_operand.vmem [shape: bf16[256,128], index: 3, kind: output, shape index: {0}]
  %s4 = inlined_call_operand.vmem [shape: f32[4,1,128], index: 4, kind: output, shape index: {1}]
  %s5 = inlined_call_operand.vmem [shape: f32[4,1,128], index: 5, kind: output, shape index: {2}]
  %6 = xla_tuple %s3, %s4, %s5
  %s7 = sld [smem:[#allocation0]]
  $region61: #{logistic_regression_forward.3} parent=0
    _
  %s9 = ssub.s32 1, %s7
  %s10 = scalar_select 0, %s9, %s7
  loop: start=0, step=1, limit=6
  $region2: #{logistic_regression_forward.3} parent=0 // loop_pre_header
    _
  $region3: #{logistic_regression_forward.3} parent=0 // loop_header
    %s12 = sphi 0, %s16
    %p13 = scmp.ge.s32.totalorder %s12, 6
    %s22 = sphi 0, %s24
    %s25 = sphi 0, %s22
    %s26 = sphi 0, %s25
    %s42 = sphi 0, %s26
    %s46 = sphi 0, %s46
    %s48 = sphi 0, %s46
    %s49 = sphi 0, %s48
    %s63 = sphi 0, %s49
    %s67 = sphi 0, %s67
    %s69 = sphi 0, %s67
    %s70 = sphi 0, %s69
    %s84 = sphi 0, %s70
    %s90 = sphi 0, %s92
    %s93 = sphi 0, %s90
    %s94 = sphi 0, %s93
    %s110 = sphi 0, %s94
    %s116 = sphi 0, %s118
    %s119 = sphi 0, %s116
    %s120 = sphi 0, %s119
    %s136 = sphi 0, %s120
    %s142 = sphi 0, %s144
    %s145 = sphi 0, %s142
    %s146 = sphi 0, %s145
    %s162 = sphi 0, %s146
  $region4: #{logistic_regression_forward.3} parent=0 // loop_header_branch
    %15 = sbr.rel (%p13) target = $region8
  $region5: #{logistic_regression_forward.3} parent=0 // loop_body
    %s17 = ssub.s32 %s12, 1
    %s18 = ssub.s32 %s12, 2
    %s19 = sadd.s32 %s12, 1
    %s20 = ssub.s32 %s12, %s19
    %p21 = scmp.eq.s32.totalorder %s20, 0
    %s23 = sadd.s32 %s22, 1
    %s24 = scalar_select %p21, %s22, %s23
    %p27 = pneg %p21
    %p28 = scmp.eq.s32.totalorder %s12, 3
    %p29 = por %p27, %p28
    %p30 = scmp.ne.s32.totalorder %s22, %s25
    %p31 = scmp.eq.s32.totalorder %s12, 0
    %p32 = por %p30, %p31
    %p33 = scmp.ne.s32.totalorder %s22, %s25
    %p34 = scmp.eq.s32.totalorder %s17, 3
    %p35 = por %p33, %p34
    %p36 = scmp.ne.s32.totalorder %s25, %s26
    %p37 = scmp.eq.s32.totalorder %s17, 0
    %p38 = por %p36, %p37
    %p39 = scmp.ne.s32.totalorder %s25, %s26
    %p40 = scmp.eq.s32.totalorder %s18, 3
    %p41 = por %p39, %p40
    %p43 = scmp.ne.s32.totalorder %s26, %s42
    %p44 = scmp.eq.s32.totalorder %s18, 0
    %p45 = por %p43, %p44
    %s47 = sadd.s32 %s46, 1
    %p50 = scmp.eq.s32.totalorder %s12, 3
    %p51 = scmp.ne.s32.totalorder %s46, %s48
    %p52 = scmp.eq.s32.totalorder %s12, 0
    %p53 = por %p51, %p52
    %p54 = scmp.ne.s32.totalorder %s46, %s48
    %p55 = scmp.eq.s32.totalorder %s17, 3
    %p56 = por %p54, %p55
    %p57 = scmp.ne.s32.totalorder %s48, %s49
    %p58 = scmp.eq.s32.totalorder %s17, 0
    %p59 = por %p57, %p58
    %p60 = scmp.ne.s32.totalorder %s48, %s49
    %p61 = scmp.eq.s32.totalorder %s18, 3
    %p62 = por %p60, %p61
    %p64 = scmp.ne.s32.totalorder %s49, %s63
    %p65 = scmp.eq.s32.totalorder %s18, 0
    %p66 = por %p64, %p65
    %s68 = sadd.s32 %s67, 1
    %p71 = scmp.eq.s32.totalorder %s12, 3
    %p72 = scmp.ne.s32.totalorder %s67, %s69
    %p73 = scmp.eq.s32.totalorder %s12, 0
    %p74 = por %p72, %p73
    %p75 = scmp.ne.s32.totalorder %s67, %s69
    %p76 = scmp.eq.s32.totalorder %s17, 3
    %p77 = por %p75, %p76
    %p78 = scmp.ne.s32.totalorder %s69, %s70
    %p79 = scmp.eq.s32.totalorder %s17, 0
    %p80 = por %p78, %p79
    %p81 = scmp.ne.s32.totalorder %s69, %s70
    %p82 = scmp.eq.s32.totalorder %s18, 3
    %p83 = por %p81, %p82
    %p85 = scmp.ne.s32.totalorder %s70, %s84
    %p86 = scmp.eq.s32.totalorder %s18, 0
    %p87 = por %p85, %p86
    %s88 = ssub.s32 %s12, %s19
    %p89 = scmp.eq.s32.totalorder %s88, 0
    %s91 = sadd.s32 %s90, 1
    %s92 = scalar_select %p89, %s90, %s91
    %p95 = pneg %p89
    %p96 = scmp.eq.s32.totalorder %s12, 3
    %p97 = por %p95, %p96
    %p98 = scmp.ne.s32.totalorder %s90, %s93
    %p99 = scmp.eq.s32.totalorder %s12, 0
    %p100 = por %p98, %p99
    %p101 = scmp.ne.s32.totalorder %s90, %s93
    %p102 = scmp.eq.s32.totalorder %s17, 3
    %p103 = por %p101, %p102
    %p104 = scmp.ne.s32.totalorder %s93, %s94
    %p105 = scmp.eq.s32.totalorder %s17, 0
    %p106 = por %p104, %p105
    %p107 = scmp.ne.s32.totalorder %s93, %s94
    %p108 = scmp.eq.s32.totalorder %s18, 3
    %p109 = por %p107, %p108
    %p111 = scmp.ne.s32.totalorder %s94, %s110
    %p112 = scmp.eq.s32.totalorder %s18, 0
    %p113 = por %p111, %p112
    %s114 = ssub.s32 %s12, %s19
    %p115 = scmp.eq.s32.totalorder %s114, 0
    %s117 = sadd.s32 %s116, 1
    %s118 = scalar_select %p115, %s116, %s117
    %p121 = pneg %p115
    %p122 = scmp.eq.s32.totalorder %s12, 3
    %p123 = por %p121, %p122
    %p124 = scmp.ne.s32.totalorder %s116, %s119
    %p125 = scmp.eq.s32.totalorder %s12, 0
    %p126 = por %p124, %p125
    %p127 = scmp.ne.s32.totalorder %s116, %s119
    %p128 = scmp.eq.s32.totalorder %s17, 3
    %p129 = por %p127, %p128
    %p130 = scmp.ne.s32.totalorder %s119, %s120
    %p131 = scmp.eq.s32.totalorder %s17, 0
    %p132 = por %p130, %p131
    %p133 = scmp.ne.s32.totalorder %s119, %s120
    %p134 = scmp.eq.s32.totalorder %s18, 3
    %p135 = por %p133, %p134
    %p137 = scmp.ne.s32.totalorder %s120, %s136
    %p138 = scmp.eq.s32.totalorder %s18, 0
    %p139 = por %p137, %p138
    %s140 = ssub.s32 %s12, %s19
    %p141 = scmp.eq.s32.totalorder %s140, 0
    %s143 = sadd.s32 %s142, 1
    %s144 = scalar_select %p141, %s142, %s143
    %p147 = pneg %p141
    %p148 = scmp.eq.s32.totalorder %s12, 3
    %p149 = por %p147, %p148
    %p150 = scmp.ne.s32.totalorder %s142, %s145
    %p151 = scmp.eq.s32.totalorder %s12, 0
    %p152 = por %p150, %p151
    %p153 = scmp.ne.s32.totalorder %s142, %s145
    %p154 = scmp.eq.s32.totalorder %s17, 3
    %p155 = por %p153, %p154
    %p156 = scmp.ne.s32.totalorder %s145, %s146
    %p157 = scmp.eq.s32.totalorder %s17, 0
    %p158 = por %p156, %p157
    %p159 = scmp.ne.s32.totalorder %s145, %s146
    %p160 = scmp.eq.s32.totalorder %s18, 3
    %p161 = por %p159, %p160
    %p163 = scmp.ne.s32.totalorder %s146, %s162
    %p164 = scmp.eq.s32.totalorder %s18, 0
    %p165 = por %p163, %p164
    %p166 = scmp.le.s32.totalorder 1, %s12
    %p167 = scmp.lt.s32.totalorder %s12, 5
    %p168 = pnand %p166, %p167
    %p169 = pneg %p168
    // Predicated region
    $region9: #{logistic_regression_forward.3} parent=5 // pred_check
      _
    $region10: #{logistic_regression_forward.3} parent=5 // pred_check_branch
      %171 = sbr.rel (%p168) target = $region12
    $region11: #{logistic_regression_forward.3} parent=5 // pred_region
      %s172 = ssub.s32 %s12, 1
      // Predicated region
      $region13: #{logistic_regression_forward.3} parent=11 // pred_check
        %p173 = pneg %p59
      $region14: #{logistic_regression_forward.3} parent=11 // pred_check_branch
        %175 = sbr.rel (%p173) target = $region16
      $region15: #{logistic_regression_forward.3} parent=11 // pred_region
        _
      $region16: #{logistic_regression_forward.3} parent=11 // pred_fallthru
        _
      // Predicated region
      $region17: #{logistic_regression_forward.3} parent=11 // pred_check
        %p176 = pneg %p80
      $region18: #{logistic_regression_forward.3} parent=11 // pred_check_branch
        %178 = sbr.rel (%p176) target = $region20
      $region19: #{logistic_regression_forward.3} parent=11 // pred_region
        _
      $region20: #{logistic_regression_forward.3} parent=11 // pred_fallthru
        _
    $region12: #{logistic_regression_forward.3} parent=5 // pred_fallthru
      _
    %p179 = scmp.lt.s32.totalorder %s12, 4
    // Predicated region
    $region21: #{logistic_regression_forward.3} parent=5 // pred_check
      %p180 = pneg %p179
    $region22: #{logistic_regression_forward.3} parent=5 // pred_check_branch
      %182 = sbr.rel (%p180) target = $region24
    $region23: #{logistic_regression_forward.3} parent=5 // pred_region
      // Predicated region
      $region25: #{logistic_regression_forward.3} parent=23 // pred_check
        %p183 = pneg %p32
      $region26: #{logistic_regression_forward.3} parent=23 // pred_check_branch
        %185 = sbr.rel (%p183) target = $region28
      $region27: #{logistic_regression_forward.3} parent=23 // pred_region
        %s186 = smul.u32 8, %s12
        %p187 = scmp.lt.s32.totalorder %s186, 31
        %s188 = scalar_select %p187, %s186, 31
        %s189 = smul.addr %s188, 4
        %s190 = scalar_lea.vmem %s0, %s189
        %s191 = smul.u32 8, %s12
      $region28: #{logistic_regression_forward.3} parent=23 // pred_fallthru
        _
    $region24: #{logistic_regression_forward.3} parent=5 // pred_fallthru
      _
    %p192 = scmp.le.s32.totalorder 1, %s12
    %p193 = scmp.lt.s32.totalorder %s12, 5
    %p194 = pnand %p192, %p193
    %p195 = pneg %p194
    // Predicated region
    $region29: #{logistic_regression_forward.3} parent=5 // pred_check
      _
    $region30: #{logistic_regression_forward.3} parent=5 // pred_check_branch
      %197 = sbr.rel (%p194) target = $region32
    $region31: #{logistic_regression_forward.3} parent=5 // pred_region
      %s198 = ssub.s32 %s12, 1
      %s199 = smul.u32 8, %s17
      %p200 = scmp.lt.s32.totalorder %s199, 31
      %s201 = scalar_select %p200, %s199, 31
      %s202 = smul.addr %s201, 4
      %s203 = scalar_lea.vmem %s0, %s202
      %p204 = pneg %p38
      %p205 = pneg %p35
      %p206 = pneg %p59
      %p207 = pneg %p56
      %p208 = pneg %p80
      %p209 = pneg %p77
      %p210 = pneg %p106
      %p211 = pneg %p103
      %s212 = smul.u32 8, %s17
      %p213 = scmp.lt.s32.totalorder %s212, 31
      %s214 = scalar_select %p213, %s212, 31
      %s215 = smul.addr %s214, 4
      %s216 = scalar_lea.vmem %s3, %s215
      %p217 = pneg %p132
      %p218 = pneg %p129
      %p219 = scmp.lt.s32.totalorder %s17, 3
      %s220 = scalar_select %p219, %s17, 3
      %s221 = scalar_lea.vmem %s4, %s220
      %p222 = pneg %p158
      %p223 = pneg %p155
      %p224 = scmp.lt.s32.totalorder %s17, 3
      %s225 = scalar_select %p224, %s17, 3
      %s226 = scalar_lea.vmem %s5, %s225
      %s227 = smul.u32 8, %s17
      %p228 = scmp.lt.s32.totalorder %s227, 31
      %s229 = scalar_select %p228, %s227, 31
      %s230 = smul.addr %s229, 4
      %s231 = scalar_lea.vmem %s0, %s230
      %s232 = smul.u32 8, %s17
      %s233 = smul.u32 8, %s17
      %p234 = scmp.lt.s32.totalorder %s233, 31
      %s235 = scalar_select %p234, %s233, 31
      %s236 = smul.addr %s235, 4
      %s237 = scalar_lea.vmem %s3, %s236
      %s238 = smul.u32 8, %s17
      %p239 = scmp.lt.s32.totalorder %s17, 3
      %s240 = scalar_select %p239, %s17, 3
      %s241 = scalar_lea.vmem %s4, %s240
      %p242 = scmp.lt.s32.totalorder %s17, 3
      %s243 = scalar_select %p242, %s17, 3
      %s244 = scalar_lea.vmem %s5, %s243
      %v246 = vld [vmem:[%s231] sm:$0xf]
      %v247 = vld [vmem:[%s231 + $0x4] sm:$0xf]
      %v248 = vld [vmem:[%s231 + $0x8] sm:$0xf]
      %v249 = vld [vmem:[%s231 + $0xc] sm:$0xf]
      %v250 = vld [vmem:[%s231 + $0x10] sm:$0xf]
      %v251 = vld [vmem:[%s231 + $0x14] sm:$0xf]
      %v252 = vld [vmem:[%s231 + $0x18] sm:$0xf]
      %v253 = vld [vmem:[%s231 + $0x1c] sm:$0xf]
      %v254 = vld [vmem:[%s1] sm:$0xf]
      %v255 = vld [vmem:[%s1 + $0x4] sm:$0xf]
      %v256 = vld [vmem:[%s1 + $0x8] sm:$0xf]
      %v257 = vld [vmem:[%s1 + $0xc] sm:$0xf]
      %v258 = vld [vmem:[%s2] sm:$0x1]
      %v260 = vlaneseq
      %v261 = vshrl.u32 %v260, 7
      %v262 = vsub.s32 0, %v261
      %v263 = vrot.slane %v258, %v262
      %v273 = vunpack.c.l.b16 %v246
      %v274 = vunpack.c.l.b16 %v247
      %v275 = vunpack.c.l.b16 %v248
      %v276 = vunpack.c.l.b16 %v249
      %v277 = vunpack.c.l.b16 %v250
      %v278 = vunpack.c.l.b16 %v251
      %v279 = vunpack.c.l.b16 %v252
      %v280 = vunpack.c.l.b16 %v253
      %v281 = vpack.c.b16 %v274, %v273
      %v282 = vpack.c.b16 %v276, %v275
      %v283 = vpack.c.b16 %v278, %v277
      %v284 = vpack.c.b16 %v280, %v279
      %v289 = vunpack.c.l.b16 %v254
      %v290 = vunpack.c.l.b16 %v255
      %v291 = vunpack.c.l.b16 %v256
      %v292 = vunpack.c.l.b16 %v257
      %v293 = vpack.c.b16 %v290, %v289
      %v294 = vpack.c.b16 %v292, %v291
      %vm297 = vcmask 261120
      %v299 = vsel %vm297, %v281, 0
      %v302 = vsel %vm297, %v282, 0
      %v305 = vsel %vm297, %v283, 0
      %v308 = vsel %vm297, %v284, 0
      %310 = vmatprep.subr.bf16.mxu0 0
      %311 = vmatpush1.bf16.msra.mxu0 0
      %312 = vmatprep.subr.bf16.mxu0 0
      %313 = vmatpush1.bf16.msra.mxu0 0
      %314 = vmatprep.subr.bf16.mxu0 0
      %315 = vmatpush1.bf16.msra.mxu0 0
      %316 = vmatprep.subr.bf16.mxu0 0
      %317 = vmatpush1.bf16.msra.mxu0 0
      %318 = vmatprep.subr.bf16.mxu0 0
      %319 = vmatpush1.bf16.msra.mxu0 0
      %320 = vmatprep.subr.bf16.mxu0 0
      %321 = vmatpush1.bf16.msra.mxu0 0
      %322 = vmatprep.subr.bf16.mxu0 0
      %323 = vmatpush1.bf16.msra.mxu0 %v294
      %324 = vmatprep.subr.bf16.mxu0 0
      %325 = vmatpush1.bf16.msra.mxu0 %v293
      %326 = vmatprep.subr.bf16.mxu0 0
      %327 = vmatpush2.bf16.msra.mxu0 0
      %328 = vmatprep.subr.bf16.mxu0 0
      %329 = vmatpush2.bf16.msra.mxu0 0
      %330 = vmatprep.subr.bf16.mxu0 0
      %331 = vmatpush2.bf16.msra.mxu0 0
      %332 = vmatprep.subr.bf16.mxu0 0
      %333 = vmatpush2.bf16.msra.mxu0 0
      %334 = vmatprep.subr.bf16.mxu0 0
      %335 = vmatpush2.bf16.msra.mxu0 0
      %336 = vmatprep.subr.bf16.mxu0 0
      %337 = vmatpush2.bf16.msra.mxu0 0
      %338 = vmatprep.subr.bf16.mxu0 0
      %339 = vmatpush2.bf16.msra.mxu0 0
      %340 = vmatprep.subr.bf16.mxu0 0
      %341 = vmatpush2.bf16.msra.mxu0 0
      %342 = vmatprep.mubr.bf16.mxu0 0
      %343 = vmatmul.mubr.bf16.gmra.mxu0 %v299
      %v344 = vpop.f32.mrf.mxu0
      %v345 = vadd.f32 %v263, %v344
      %v346 = vpop.f32.mrf.mxu0
      %v347 = vpop.f32.mrf.mxu0
      %v348 = vadd.f32 %v263, %v347
      %v349 = vpop.f32.mrf.mxu0
      %350 = vmatprep.mubr.bf16.mxu0 0
      %351 = vmatmul.mubr.bf16.gmra.mxu0 %v302
      %v352 = vpop.f32.mrf.mxu0
      %v353 = vadd.f32 %v263, %v352
      %v354 = vpop.f32.mrf.mxu0
      %v355 = vpop.f32.mrf.mxu0
      %v356 = vadd.f32 %v263, %v355
      %v357 = vpop.f32.mrf.mxu0
      %358 = vmatprep.mubr.bf16.mxu0 0
      %359 = vmatmul.mubr.bf16.gmra.mxu0 %v305
      %v360 = vpop.f32.mrf.mxu0
      %v361 = vadd.f32 %v263, %v360
      %v362 = vpop.f32.mrf.mxu0
      %v363 = vpop.f32.mrf.mxu0
      %v364 = vadd.f32 %v263, %v363
      %v365 = vpop.f32.mrf.mxu0
      %366 = vmatprep.mubr.bf16.mxu0 0
      %367 = vmatmul.mubr.bf16.gmra.mxu0 %v308
      %v368 = vpop.f32.mrf.mxu0
      %v369 = vadd.f32 %v263, %v368
      %v370 = vpop.f32.mrf.mxu0
      %v371 = vpop.f32.mrf.mxu0
      %v372 = vadd.f32 %v263, %v371
      %v373 = vpop.f32.mrf.mxu0
      %374 = vdwg.mxu0
      %v375 = vpack.c.bf16 %v348, %v345
      %v376 = vpack.c.bf16 %v356, %v353
      %v377 = vpack.c.bf16 %v364, %v361
      %v378 = vpack.c.bf16 %v372, %v369
      %v383 = vunpack.c.l.b16 %v375
      %v384 = vunpack.c.h.b16 %v375
      %v385 = vunpack.c.l.b16 %v376
      %v386 = vunpack.c.h.b16 %v376
      %v387 = vunpack.c.l.b16 %v377
      %v388 = vunpack.c.h.b16 %v377
      %v389 = vunpack.c.l.b16 %v378
      %v390 = vunpack.c.h.b16 %v378
      %v391 = vpack.c.b16 %v383, %v383
      %v392 = vpack.c.b16 %v384, %v384
      %v393 = vpack.c.b16 %v385, %v385
      %v394 = vpack.c.b16 %v386, %v386
      %v395 = vpack.c.b16 %v387, %v387
      %v396 = vpack.c.b16 %v388, %v388
      %v397 = vpack.c.b16 %v389, %v389
      %v398 = vpack.c.b16 %v390, %v390
      %407 = vst [vmem:[%s237] sm:$0xf] %v391
      %408 = vst [vmem:[%s237 + $0x4] sm:$0xf] %v392
      %409 = vst [vmem:[%s237 + $0x8] sm:$0xf] %v393
      %410 = vst [vmem:[%s237 + $0xc] sm:$0xf] %v394
      %411 = vst [vmem:[%s237 + $0x10] sm:$0xf] %v395
      %412 = vst [vmem:[%s237 + $0x14] sm:$0xf] %v396
      %413 = vst [vmem:[%s237 + $0x18] sm:$0xf] %v397
      %414 = vst [vmem:[%s237 + $0x1c] sm:$0xf] %v398
      %v415 = vunpack.c.l.bf16 %v375
      %v416 = vunpack.c.h.bf16 %v375
      %v417 = vunpack.c.l.bf16 %v376
      %v418 = vunpack.c.h.bf16 %v376
      %v419 = vunpack.c.l.bf16 %v377
      %v420 = vunpack.c.h.bf16 %v377
      %v421 = vunpack.c.l.bf16 %v378
      %v422 = vunpack.c.h.bf16 %v378
      %v423 = vadd.f32 %v415, %v416
      %v424 = vadd.f32 %v423, %v417
      %v425 = vadd.f32 %v424, %v418
      %v426 = vadd.f32 %v425, %v419
      %v427 = vadd.f32 %v426, %v420
      %v428 = vadd.f32 %v427, %v421
      %v429 = vadd.f32 %v428, %v422
      %v430 = vrot.slane %v429, 4
      %v431 = vadd.f32 %v429, %v430
      %v432 = vrot.slane %v431, 2
      %v433 = vadd.f32 %v431, %v432
      %v434 = vrot.slane %v433, 1
      %v435 = vadd.f32 %v433, %v434
      %436 = vst [vmem:[%s241] sm:$0x1] %v435
      %v437 = vmul.f32 %v415, %v415
      %v438 = vmul.f32 %v416, %v416
      %v439 = vmul.f32 %v417, %v417
      %v440 = vmul.f32 %v418, %v418
      %v441 = vmul.f32 %v419, %v419
      %v442 = vmul.f32 %v420, %v420
      %v443 = vmul.f32 %v421, %v421
      %v444 = vmul.f32 %v422, %v422
      %v445 = vadd.f32 %v437, %v438
      %v446 = vadd.f32 %v445, %v439
      %v447 = vadd.f32 %v446, %v440
      %v448 = vadd.f32 %v447, %v441
      %v449 = vadd.f32 %v448, %v442
      %v450 = vadd.f32 %v449, %v443
      %v451 = vadd.f32 %v450, %v444
      %v452 = vrot.slane %v451, 4
      %v453 = vadd.f32 %v451, %v452
      %v454 = vrot.slane %v453, 2
      %v455 = vadd.f32 %v453, %v454
      %v456 = vrot.slane %v455, 1
      %v457 = vadd.f32 %v455, %v456
      %458 = vst [vmem:[%s244] sm:$0x1] %v457
      %s459 = smul.u32 8, %s17
      %p460 = scmp.lt.s32.totalorder %s459, 31
      %s461 = scalar_select %p460, %s459, 31
      %s462 = smul.addr %s461, 4
      %s463 = scalar_lea.vmem %s3, %s462
      %p464 = scmp.lt.s32.totalorder %s17, 3
      %s465 = scalar_select %p464, %s17, 3
      %s466 = scalar_lea.vmem %s4, %s465
      %p467 = scmp.lt.s32.totalorder %s17, 3
      %s468 = scalar_select %p467, %s17, 3
      %s469 = scalar_lea.vmem %s5, %s468
      // Predicated region
      $region33: #{logistic_regression_forward.3} parent=31 // pred_check
        %p470 = pneg %p103
      $region34: #{logistic_regression_forward.3} parent=31 // pred_check_branch
        %472 = sbr.rel (%p470) target = $region36
      $region35: #{logistic_regression_forward.3} parent=31 // pred_region
        %s473 = smul.u32 8, %s17
      $region36: #{logistic_regression_forward.3} parent=31 // pred_fallthru
        _
      // Predicated region
      $region37: #{logistic_regression_forward.3} parent=31 // pred_check
        %p474 = pneg %p129
      $region38: #{logistic_regression_forward.3} parent=31 // pred_check_branch
        %476 = sbr.rel (%p474) target = $region40
      $region39: #{logistic_regression_forward.3} parent=31 // pred_region
        _
      $region40: #{logistic_regression_forward.3} parent=31 // pred_fallthru
        _
      // Predicated region
      $region41: #{logistic_regression_forward.3} parent=31 // pred_check
        %p477 = pneg %p155
      $region42: #{logistic_regression_forward.3} parent=31 // pred_check_branch
        %479 = sbr.rel (%p477) target = $region44
      $region43: #{logistic_regression_forward.3} parent=31 // pred_region
        _
      $region44: #{logistic_regression_forward.3} parent=31 // pred_fallthru
        _
    $region32: #{logistic_regression_forward.3} parent=5 // pred_fallthru
      _
    %p480 = scmp.le.s32.totalorder 2, %s12
    // Predicated region
    $region45: #{logistic_regression_forward.3} parent=5 // pred_check
      %p481 = pneg %p480
    $region46: #{logistic_regression_forward.3} parent=5 // pred_check_branch
      %483 = sbr.rel (%p481) target = $region48
    $region47: #{logistic_regression_forward.3} parent=5 // pred_region
      %s484 = ssub.s32 %s12, 2
      // Predicated region
      $region49: #{logistic_regression_forward.3} parent=47 // pred_check
        %p485 = pneg %p109
      $region50: #{logistic_regression_forward.3} parent=47 // pred_check_branch
        %487 = sbr.rel (%p485) target = $region52
      $region51: #{logistic_regression_forward.3} parent=47 // pred_region
        %s488 = smul.u32 8, %s18
        %p489 = scmp.lt.s32.totalorder %s488, 31
        %s490 = scalar_select %p489, %s488, 31
        %s491 = smul.addr %s490, 4
        %s492 = scalar_lea.vmem %s3, %s491
      $region52: #{logistic_regression_forward.3} parent=47 // pred_fallthru
        _
      // Predicated region
      $region53: #{logistic_regression_forward.3} parent=47 // pred_check
        %p493 = pneg %p135
      $region54: #{logistic_regression_forward.3} parent=47 // pred_check_branch
        %495 = sbr.rel (%p493) target = $region56
      $region55: #{logistic_regression_forward.3} parent=47 // pred_region
        %p496 = scmp.lt.s32.totalorder %s18, 3
        %s497 = scalar_select %p496, %s18, 3
        %s498 = scalar_lea.vmem %s4, %s497
      $region56: #{logistic_regression_forward.3} parent=47 // pred_fallthru
        _
      // Predicated region
      $region57: #{logistic_regression_forward.3} parent=47 // pred_check
        %p499 = pneg %p161
      $region58: #{logistic_regression_forward.3} parent=47 // pred_check_branch
        %501 = sbr.rel (%p499) target = $region60
      $region59: #{logistic_regression_forward.3} parent=47 // pred_region
        %p502 = scmp.lt.s32.totalorder %s18, 3
        %s503 = scalar_select %p502, %s18, 3
        %s504 = scalar_lea.vmem %s5, %s503
      $region60: #{logistic_regression_forward.3} parent=47 // pred_fallthru
        _
    $region48: #{logistic_regression_forward.3} parent=5 // pred_fallthru
      _
  $region6: #{logistic_regression_forward.3} parent=0 // loop_footer
    %s16 = sadd.s32 1, %s12
  $region7: #{logistic_regression_forward.3} parent=0 // loop_footer_branch
    %11 = sbr.rel target = $region3
  $region8: #{logistic_regression_forward.3} parent=0 // loop_exit
    _

// kernel: logistic_regression_forward.4
$region0: #{logistic_regression_forward.4}
  #allocation0 [shape = 'u32[]', space=smem, size = 0x4, offset = 0x4, fixed_abs, tag = 'smem constant byte address 0x4 - core index']
  #allocation1 [shape = 'u32[144,128]{1,0:T(1,128)}', space=vmem, size = 0x12000, scoped, tag = 'internal scratch']
  %s0 = inlined_call_operand.vmem [shape: bf16[256,128], index: 0, kind: input, shape index: {}]
  %s1 = inlined_call_operand.vmem [shape: f32[1,128], index: 1, kind: input, shape index: {}]
  %s2 = inlined_call_operand.vmem [shape: f32[1,128], index: 2, kind: input, shape index: {}]
  %s3 = inlined_call_operand.vmem [shape: bf16[128,128], index: 3, kind: input, shape index: {}]
  %s4 = inlined_call_operand.vmem [shape: f32[1,128], index: 4, kind: input, shape index: {}]
  %s5 = inlined_call_operand.vmem [shape: bf16[256,128], index: 5, kind: output, shape index: {0}]
  %s6 = inlined_call_operand.vmem [shape: f32[4,1,128], index: 6, kind: output, shape index: {1}]
  %s7 = inlined_call_operand.vmem [shape: f32[4,1,128], index: 7, kind: output, shape index: {2}]
  %8 = xla_tuple %s5, %s6, %s7
  %s9 = sld [smem:[#allocation0]]
  $region69: #{logistic_regression_forward.4} parent=0
    _
  %s11 = ssub.s32 1, %s9
  %s12 = scalar_select 0, %s11, %s9
  loop: start=0, step=1, limit=6
  $region2: #{logistic_regression_forward.4} parent=0 // loop_pre_header
    _
  $region3: #{logistic_regression_forward.4} parent=0 // loop_header
    %s14 = sphi 0, %s18
    %p15 = scmp.ge.s32.totalorder %s14, 6
    %s24 = sphi 0, %s26
    %s27 = sphi 0, %s24
    %s28 = sphi 0, %s27
    %s44 = sphi 0, %s28
    %s48 = sphi 0, %s48
    %s50 = sphi 0, %s48
    %s51 = sphi 0, %s50
    %s65 = sphi 0, %s51
    %s69 = sphi 0, %s69
    %s71 = sphi 0, %s69
    %s72 = sphi 0, %s71
    %s86 = sphi 0, %s72
    %s90 = sphi 0, %s90
    %s92 = sphi 0, %s90
    %s93 = sphi 0, %s92
    %s107 = sphi 0, %s93
    %s111 = sphi 0, %s111
    %s113 = sphi 0, %s111
    %s114 = sphi 0, %s113
    %s128 = sphi 0, %s114
    %s134 = sphi 0, %s136
    %s137 = sphi 0, %s134
    %s138 = sphi 0, %s137
    %s154 = sphi 0, %s138
    %s160 = sphi 0, %s162
    %s163 = sphi 0, %s160
    %s164 = sphi 0, %s163
    %s180 = sphi 0, %s164
    %s186 = sphi 0, %s188
    %s189 = sphi 0, %s186
    %s190 = sphi 0, %s189
    %s206 = sphi 0, %s190
  $region4: #{logistic_regression_forward.4} parent=0 // loop_header_branch
    %17 = sbr.rel (%p15) target = $region8
  $region5: #{logistic_regression_forward.4} parent=0 // loop_body
    %s19 = ssub.s32 %s14, 1
    %s20 = ssub.s32 %s14, 2
    %s21 = sadd.s32 %s14, 1
    %s22 = ssub.s32 %s14, %s21
    %p23 = scmp.eq.s32.totalorder %s22, 0
    %s25 = sadd.s32 %s24, 1
    %s26 = scalar_select %p23, %s24, %s25
    %p29 = pneg %p23
    %p30 = scmp.eq.s32.totalorder %s14, 3
    %p31 = por %p29, %p30
    %p32 = scmp.ne.s32.totalorder %s24, %s27
    %p33 = scmp.eq.s32.totalorder %s14, 0
    %p34 = por %p32, %p33
    %p35 = scmp.ne.s32.totalorder %s24, %s27
    %p36 = scmp.eq.s32.totalorder %s19, 3
    %p37 = por %p35, %p36
    %p38 = scmp.ne.s32.totalorder %s27, %s28
    %p39 = scmp.eq.s32.totalorder %s19, 0
    %p40 = por %p38, %p39
    %p41 = scmp.ne.s32.totalorder %s27, %s28
    %p42 = scmp.eq.s32.totalorder %s20, 3
    %p43 = por %p41, %p42
    %p45 = scmp.ne.s32.totalorder %s28, %s44
    %p46 = scmp.eq.s32.totalorder %s20, 0
    %p47 = por %p45, %p46
    %s49 = sadd.s32 %s48, 1
    %p52 = scmp.eq.s32.totalorder %s14, 3
    %p53 = scmp.ne.s32.totalorder %s48, %s50
    %p54 = scmp.eq.s32.totalorder %s14, 0
    %p55 = por %p53, %p54
    %p56 = scmp.ne.s32.totalorder %s48, %s50
    %p57 = scmp.eq.s32.totalorder %s19, 3
    %p58 = por %p56, %p57
    %p59 = scmp.ne.s32.totalorder %s50, %s51
    %p60 = scmp.eq.s32.totalorder %s19, 0
    %p61 = por %p59, %p60
    %p62 = scmp.ne.s32.totalorder %s50, %s51
    %p63 = scmp.eq.s32.totalorder %s20, 3
    %p64 = por %p62, %p63
    %p66 = scmp.ne.s32.totalorder %s51, %s65
    %p67 = scmp.eq.s32.totalorder %s20, 0
    %p68 = por %p66, %p67
    %s70 = sadd.s32 %s69, 1
    %p73 = scmp.eq.s32.totalorder %s14, 3
    %p74 = scmp.ne.s32.totalorder %s69, %s71
    %p75 = scmp.eq.s32.totalorder %s14, 0
    %p76 = por %p74, %p75
    %p77 = scmp.ne.s32.totalorder %s69, %s71
    %p78 = scmp.eq.s32.totalorder %s19, 3
    %p79 = por %p77, %p78
    %p80 = scmp.ne.s32.totalorder %s71, %s72
    %p81 = scmp.eq.s32.totalorder %s19, 0
    %p82 = por %p80, %p81
    %p83 = scmp.ne.s32.totalorder %s71, %s72
    %p84 = scmp.eq.s32.totalorder %s20, 3
    %p85 = por %p83, %p84
    %p87 = scmp.ne.s32.totalorder %s72, %s86
    %p88 = scmp.eq.s32.totalorder %s20, 0
    %p89 = por %p87, %p88
    %s91 = sadd.s32 %s90, 1
    %p94 = scmp.eq.s32.totalorder %s14, 3
    %p95 = scmp.ne.s32.totalorder %s90, %s92
    %p96 = scmp.eq.s32.totalorder %s14, 0
    %p97 = por %p95, %p96
    %p98 = scmp.ne.s32.totalorder %s90, %s92
    %p99 = scmp.eq.s32.totalorder %s19, 3
    %p100 = por %p98, %p99
    %p101 = scmp.ne.s32.totalorder %s92, %s93
    %p102 = scmp.eq.s32.totalorder %s19, 0
    %p103 = por %p101, %p102
    %p104 = scmp.ne.s32.totalorder %s92, %s93
    %p105 = scmp.eq.s32.totalorder %s20, 3
    %p106 = por %p104, %p105
    %p108 = scmp.ne.s32.totalorder %s93, %s107
    %p109 = scmp.eq.s32.totalorder %s20, 0
    %p110 = por %p108, %p109
    %s112 = sadd.s32 %s111, 1
    %p115 = scmp.eq.s32.totalorder %s14, 3
    %p116 = scmp.ne.s32.totalorder %s111, %s113
    %p117 = scmp.eq.s32.totalorder %s14, 0
    %p118 = por %p116, %p117
    %p119 = scmp.ne.s32.totalorder %s111, %s113
    %p120 = scmp.eq.s32.totalorder %s19, 3
    %p121 = por %p119, %p120
    %p122 = scmp.ne.s32.totalorder %s113, %s114
    %p123 = scmp.eq.s32.totalorder %s19, 0
    %p124 = por %p122, %p123
    %p125 = scmp.ne.s32.totalorder %s113, %s114
    %p126 = scmp.eq.s32.totalorder %s20, 3
    %p127 = por %p125, %p126
    %p129 = scmp.ne.s32.totalorder %s114, %s128
    %p130 = scmp.eq.s32.totalorder %s20, 0
    %p131 = por %p129, %p130
    %s132 = ssub.s32 %s14, %s21
    %p133 = scmp.eq.s32.totalorder %s132, 0
    %s135 = sadd.s32 %s134, 1
    %s136 = scalar_select %p133, %s134, %s135
    %p139 = pneg %p133
    %p140 = scmp.eq.s32.totalorder %s14, 3
    %p141 = por %p139, %p140
    %p142 = scmp.ne.s32.totalorder %s134, %s137
    %p143 = scmp.eq.s32.totalorder %s14, 0
    %p144 = por %p142, %p143
    %p145 = scmp.ne.s32.totalorder %s134, %s137
    %p146 = scmp.eq.s32.totalorder %s19, 3
    %p147 = por %p145, %p146
    %p148 = scmp.ne.s32.totalorder %s137, %s138
    %p149 = scmp.eq.s32.totalorder %s19, 0
    %p150 = por %p148, %p149
    %p151 = scmp.ne.s32.totalorder %s137, %s138
    %p152 = scmp.eq.s32.totalorder %s20, 3
    %p153 = por %p151, %p152
    %p155 = scmp.ne.s32.totalorder %s138, %s154
    %p156 = scmp.eq.s32.totalorder %s20, 0
    %p157 = por %p155, %p156
    %s158 = ssub.s32 %s14, %s21
    %p159 = scmp.eq.s32.totalorder %s158, 0
    %s161 = sadd.s32 %s160, 1
    %s162 = scalar_select %p159, %s160, %s161
    %p165 = pneg %p159
    %p166 = scmp.eq.s32.totalorder %s14, 3
    %p167 = por %p165, %p166
    %p168 = scmp.ne.s32.totalorder %s160, %s163
    %p169 = scmp.eq.s32.totalorder %s14, 0
    %p170 = por %p168, %p169
    %p171 = scmp.ne.s32.totalorder %s160, %s163
    %p172 = scmp.eq.s32.totalorder %s19, 3
    %p173 = por %p171, %p172
    %p174 = scmp.ne.s32.totalorder %s163, %s164
    %p175 = scmp.eq.s32.totalorder %s19, 0
    %p176 = por %p174, %p175
    %p177 = scmp.ne.s32.totalorder %s163, %s164
    %p178 = scmp.eq.s32.totalorder %s20, 3
    %p179 = por %p177, %p178
    %p181 = scmp.ne.s32.totalorder %s164, %s180
    %p182 = scmp.eq.s32.totalorder %s20, 0
    %p183 = por %p181, %p182
    %s184 = ssub.s32 %s14, %s21
    %p185 = scmp.eq.s32.totalorder %s184, 0
    %s187 = sadd.s32 %s186, 1
    %s188 = scalar_select %p185, %s186, %s187
    %p191 = pneg %p185
    %p192 = scmp.eq.s32.totalorder %s14, 3
    %p193 = por %p191, %p192
    %p194 = scmp.ne.s32.totalorder %s186, %s189
    %p195 = scmp.eq.s32.totalorder %s14, 0
    %p196 = por %p194, %p195
    %p197 = scmp.ne.s32.totalorder %s186, %s189
    %p198 = scmp.eq.s32.totalorder %s19, 3
    %p199 = por %p197, %p198
    %p200 = scmp.ne.s32.totalorder %s189, %s190
    %p201 = scmp.eq.s32.totalorder %s19, 0
    %p202 = por %p200, %p201
    %p203 = scmp.ne.s32.totalorder %s189, %s190
    %p204 = scmp.eq.s32.totalorder %s20, 3
    %p205 = por %p203, %p204
    %p207 = scmp.ne.s32.totalorder %s190, %s206
    %p208 = scmp.eq.s32.totalorder %s20, 0
    %p209 = por %p207, %p208
    %p210 = scmp.le.s32.totalorder 1, %s14
    %p211 = scmp.lt.s32.totalorder %s14, 5
    %p212 = pnand %p210, %p211
    %p213 = pneg %p212
    // Predicated region
    $region9: #{logistic_regression_forward.4} parent=5 // pred_check
      _
    $region10: #{logistic_regression_forward.4} parent=5 // pred_check_branch
      %215 = sbr.rel (%p212) target = $region12
    $region11: #{logistic_regression_forward.4} parent=5 // pred_region
      %s216 = ssub.s32 %s14, 1
      // Predicated region
      $region13: #{logistic_regression_forward.4} parent=11 // pred_check
        %p217 = pneg %p61
      $region14: #{logistic_regression_forward.4} parent=11 // pred_check_branch
        %219 = sbr.rel (%p217) target = $region16
      $region15: #{logistic_regression_forward.4} parent=11 // pred_region
        _
      $region16: #{logistic_regression_forward.4} parent=11 // pred_fallthru
        _
      // Predicated region
      $region17: #{logistic_regression_forward.4} parent=11 // pred_check
        %p220 = pneg %p82
      $region18: #{logistic_regression_forward.4} parent=11 // pred_check_branch
        %222 = sbr.rel (%p220) target = $region20
      $region19: #{logistic_regression_forward.4} parent=11 // pred_region
        _
      $region20: #{logistic_regression_forward.4} parent=11 // pred_fallthru
        _
      // Predicated region
      $region21: #{logistic_regression_forward.4} parent=11 // pred_check
        %p223 = pneg %p103
      $region22: #{logistic_regression_forward.4} parent=11 // pred_check_branch
        %225 = sbr.rel (%p223) target = $region24
      $region23: #{logistic_regression_forward.4} parent=11 // pred_region
        _
      $region24: #{logistic_regression_forward.4} parent=11 // pred_fallthru
        _
      // Predicated region
      $region25: #{logistic_regression_forward.4} parent=11 // pred_check
        %p226 = pneg %p124
      $region26: #{logistic_regression_forward.4} parent=11 // pred_check_branch
        %228 = sbr.rel (%p226) target = $region28
      $region27: #{logistic_regression_forward.4} parent=11 // pred_region
        _
      $region28: #{logistic_regression_forward.4} parent=11 // pred_fallthru
        _
    $region12: #{logistic_regression_forward.4} parent=5 // pred_fallthru
      _
    %p229 = scmp.lt.s32.totalorder %s14, 4
    // Predicated region
    $region29: #{logistic_regression_forward.4} parent=5 // pred_check
      %p230 = pneg %p229
    $region30: #{logistic_regression_forward.4} parent=5 // pred_check_branch
      %232 = sbr.rel (%p230) target = $region32
    $region31: #{logistic_regression_forward.4} parent=5 // pred_region
      // Predicated region
      $region33: #{logistic_regression_forward.4} parent=31 // pred_check
        %p233 = pneg %p34
      $region34: #{logistic_regression_forward.4} parent=31 // pred_check_branch
        %235 = sbr.rel (%p233) target = $region36
      $region35: #{logistic_regression_forward.4} parent=31 // pred_region
        %s236 = smul.u32 8, %s14
        %p237 = scmp.lt.s32.totalorder %s236, 31
        %s238 = scalar_select %p237, %s236, 31
        %s239 = smul.addr %s238, 4
        %s240 = scalar_lea.vmem %s0, %s239
        %s241 = smul.u32 8, %s14
      $region36: #{logistic_regression_forward.4} parent=31 // pred_fallthru
        _
    $region32: #{logistic_regression_forward.4} parent=5 // pred_fallthru
      _
    %p242 = scmp.le.s32.totalorder 1, %s14
    %p243 = scmp.lt.s32.totalorder %s14, 5
    %p244 = pnand %p242, %p243
    %p245 = pneg %p244
    // Predicated region
    $region37: #{logistic_regression_forward.4} parent=5 // pred_check
      _
    $region38: #{logistic_regression_forward.4} parent=5 // pred_check_branch
      %247 = sbr.rel (%p244) target = $region40
    $region39: #{logistic_regression_forward.4} parent=5 // pred_region
      %s248 = ssub.s32 %s14, 1
      %s249 = smul.u32 8, %s19
      %p250 = scmp.lt.s32.totalorder %s249, 31
      %s251 = scalar_select %p250, %s249, 31
      %s252 = smul.addr %s251, 4
      %s253 = scalar_lea.vmem %s0, %s252
      %p254 = pneg %p40
      %p255 = pneg %p37
      %p256 = pneg %p61
      %p257 = pneg %p58
      %p258 = pneg %p82
      %p259 = pneg %p79
      %p260 = pneg %p103
      %p261 = pneg %p100
      %p262 = pneg %p124
      %p263 = pneg %p121
      %p264 = pneg %p150
      %p265 = pneg %p147
      %s266 = smul.u32 8, %s19
      %p267 = scmp.lt.s32.totalorder %s266, 31
      %s268 = scalar_select %p267, %s266, 31
      %s269 = smul.addr %s268, 4
      %s270 = scalar_lea.vmem %s5, %s269
      %p271 = pneg %p176
      %p272 = pneg %p173
      %p273 = scmp.lt.s32.totalorder %s19, 3
      %s274 = scalar_select %p273, %s19, 3
      %s275 = scalar_lea.vmem %s6, %s274
      %p276 = pneg %p202
      %p277 = pneg %p199
      %p278 = scmp.lt.s32.totalorder %s19, 3
      %s279 = scalar_select %p278, %s19, 3
      %s280 = scalar_lea.vmem %s7, %s279
      %s281 = smul.u32 8, %s19
      %p282 = scmp.lt.s32.totalorder %s281, 31
      %s283 = scalar_select %p282, %s281, 31
      %s284 = smul.addr %s283, 4
      %s285 = scalar_lea.vmem %s0, %s284
      %s286 = smul.u32 8, %s19
      %s287 = smul.u32 8, %s19
      %p288 = scmp.lt.s32.totalorder %s287, 31
      %s289 = scalar_select %p288, %s287, 31
      %s290 = smul.addr %s289, 4
      %s291 = scalar_lea.vmem %s5, %s290
      %s292 = smul.u32 8, %s19
      %p293 = scmp.lt.s32.totalorder %s19, 3
      %s294 = scalar_select %p293, %s19, 3
      %s295 = scalar_lea.vmem %s6, %s294
      %p296 = scmp.lt.s32.totalorder %s19, 3
      %s297 = scalar_select %p296, %s19, 3
      %s298 = scalar_lea.vmem %s7, %s297
      %v300 = vld [vmem:[%s285] sm:$0xf]
      %v301 = vld [vmem:[%s285 + $0x4] sm:$0xf]
      %v302 = vld [vmem:[%s285 + $0x8] sm:$0xf]
      %v303 = vld [vmem:[%s285 + $0xc] sm:$0xf]
      %v304 = vld [vmem:[%s285 + $0x10] sm:$0xf]
      %v305 = vld [vmem:[%s285 + $0x14] sm:$0xf]
      %v306 = vld [vmem:[%s285 + $0x18] sm:$0xf]
      %v307 = vld [vmem:[%s285 + $0x1c] sm:$0xf]
      %v308 = vunpack.c.l.bf16 %v300
      %v309 = vunpack.c.l.bf16 %v301
      %v310 = vunpack.c.l.bf16 %v302
      %v311 = vunpack.c.l.bf16 %v303
      %v312 = vunpack.c.l.bf16 %v304
      %v313 = vunpack.c.l.bf16 %v305
      %v314 = vunpack.c.l.bf16 %v306
      %v315 = vunpack.c.l.bf16 %v307
      %v316 = vld [vmem:[%s1] sm:$0x1]
      %v318 = vlaneseq
      %v319 = vshrl.u32 %v318, 7
      %v320 = vsub.s32 0, %v319
      %v321 = vrot.slane %v316, %v320
      %v323 = vmul.f32 %v308, %v321
      %v324 = vmul.f32 %v309, %v321
      %v325 = vmul.f32 %v310, %v321
      %v326 = vmul.f32 %v311, %v321
      %v327 = vmul.f32 %v312, %v321
      %v328 = vmul.f32 %v313, %v321
      %v329 = vmul.f32 %v314, %v321
      %v330 = vmul.f32 %v315, %v321
      %v331 = vld [vmem:[%s2] sm:$0x1]
      %v333 = vlaneseq
      %v334 = vshrl.u32 %v333, 7
      %v335 = vsub.s32 0, %v334
      %v336 = vrot.slane %v331, %v335
      %v338 = vadd.f32 %v323, %v336
      %v339 = vadd.f32 %v324, %v336
      %v340 = vadd.f32 %v325, %v336
      %v341 = vadd.f32 %v326, %v336
      %v342 = vadd.f32 %v327, %v336
      %v343 = vadd.f32 %v328, %v336
      %v344 = vadd.f32 %v329, %v336
      %v345 = vadd.f32 %v330, %v336
      %v346 = vmax.f32 %v338, 0.0
      %v347 = vmax.f32 %v339, 0.0
      %v348 = vmax.f32 %v340, 0.0
      %v349 = vmax.f32 %v341, 0.0
      %v350 = vmax.f32 %v342, 0.0
      %v351 = vmax.f32 %v343, 0.0
      %v352 = vmax.f32 %v344, 0.0
      %v353 = vmax.f32 %v345, 0.0
      %v354 = vpack.c.bf16 %v347, %v346
      %v355 = vpack.c.bf16 %v349, %v348
      %v356 = vpack.c.bf16 %v351, %v350
      %v357 = vpack.c.bf16 %v353, %v352
      %v358 = vld [vmem:[%s3] sm:$0xf]
      %v359 = vld [vmem:[%s3 + $0x4] sm:$0xf]
      %v360 = vld [vmem:[%s3 + $0x8] sm:$0xf]
      %v361 = vld [vmem:[%s3 + $0xc] sm:$0xf]
      %v362 = vld [vmem:[%s3 + $0x10] sm:$0xf]
      %v363 = vld [vmem:[%s3 + $0x14] sm:$0xf]
      %v364 = vld [vmem:[%s3 + $0x18] sm:$0xf]
      %v365 = vld [vmem:[%s3 + $0x1c] sm:$0xf]
      %v366 = vld [vmem:[%s3 + $0x20] sm:$0xf]
      %v367 = vld [vmem:[%s3 + $0x24] sm:$0xf]
      %v368 = vld [vmem:[%s3 + $0x28] sm:$0xf]
      %v369 = vld [vmem:[%s3 + $0x2c] sm:$0xf]
      %v370 = vld [vmem:[%s3 + $0x30] sm:$0xf]
      %v371 = vld [vmem:[%s3 + $0x34] sm:$0xf]
      %v372 = vld [vmem:[%s3 + $0x38] sm:$0xf]
      %v373 = vld [vmem:[%s3 + $0x3c] sm:$0xf]
      %v374 = vld [vmem:[%s4] sm:$0x1]
      %v376 = vlaneseq
      %v377 = vshrl.u32 %v376, 7
      %v378 = vsub.s32 0, %v377
      %v379 = vrot.slane %v374, %v378
      %v397 = vunpack.c.l.b16 %v358
      %v398 = vunpack.c.l.b16 %v359
      %v399 = vunpack.c.l.b16 %v360
      %v400 = vunpack.c.l.b16 %v361
      %v401 = vunpack.c.l.b16 %v362
      %v402 = vunpack.c.l.b16 %v363
      %v403 = vunpack.c.l.b16 %v364
      %v404 = vunpack.c.l.b16 %v365
      %v405 = vunpack.c.l.b16 %v366
      %v406 = vunpack.c.l.b16 %v367
      %v407 = vunpack.c.l.b16 %v368
      %v408 = vunpack.c.l.b16 %v369
      %v409 = vunpack.c.l.b16 %v370
      %v410 = vunpack.c.l.b16 %v371
      %v411 = vunpack.c.l.b16 %v372
      %v412 = vunpack.c.l.b16 %v373
      %v413 = vpack.c.b16 %v398, %v397
      %v414 = vpack.c.b16 %v400, %v399
      %v415 = vpack.c.b16 %v402, %v401
      %v416 = vpack.c.b16 %v404, %v403
      %v417 = vpack.c.b16 %v406, %v405
      %v418 = vpack.c.b16 %v408, %v407
      %v419 = vpack.c.b16 %v410, %v409
      %v420 = vpack.c.b16 %v412, %v411
      %429 = vmatprep.subr.bf16.mxu0 0
      %430 = vmatpush1.bf16.msra.mxu0 %v420
      %431 = vmatprep.subr.bf16.mxu0 0
      %432 = vmatpush1.bf16.msra.mxu0 %v419
      %433 = vmatprep.subr.bf16.mxu0 0
      %434 = vmatpush1.bf16.msra.mxu0 %v418
      %435 = vmatprep.subr.bf16.mxu0 0
      %436 = vmatpush1.bf16.msra.mxu0 %v417
      %437 = vmatprep.subr.bf16.mxu0 0
      %438 = vmatpush1.bf16.msra.mxu0 %v416
      %439 = vmatprep.subr.bf16.mxu0 0
      %440 = vmatpush1.bf16.msra.mxu0 %v415
      %441 = vmatprep.subr.bf16.mxu0 0
      %442 = vmatpush1.bf16.msra.mxu0 %v414
      %443 = vmatprep.subr.bf16.mxu0 0
      %444 = vmatpush1.bf16.msra.mxu0 %v413
      %445 = vmatprep.subr.bf16.mxu0 0
      %446 = vmatpush2.bf16.msra.mxu0 0
      %447 = vmatprep.subr.bf16.mxu0 0
      %448 = vmatpush2.bf16.msra.mxu0 0
      %449 = vmatprep.subr.bf16.mxu0 0
      %450 = vmatpush2.bf16.msra.mxu0 0
      %451 = vmatprep.subr.bf16.mxu0 0
      %452 = vmatpush2.bf16.msra.mxu0 0
      %453 = vmatprep.subr.bf16.mxu0 0
      %454 = vmatpush2.bf16.msra.mxu0 0
      %455 = vmatprep.subr.bf16.mxu0 0
      %456 = vmatpush2.bf16.msra.mxu0 0
      %457 = vmatprep.subr.bf16.mxu0 0
      %458 = vmatpush2.bf16.msra.mxu0 0
      %459 = vmatprep.subr.bf16.mxu0 0
      %460 = vmatpush2.bf16.msra.mxu0 0
      %461 = vmatprep.mubr.bf16.mxu0 0
      %462 = vmatmul.mubr.bf16.gmra.mxu0 %v354
      %v463 = vpop.f32.mrf.mxu0
      %v464 = vadd.f32 %v379, %v463
      %v465 = vpop.f32.mrf.mxu0
      %v466 = vpop.f32.mrf.mxu0
      %v467 = vadd.f32 %v379, %v466
      %v468 = vpop.f32.mrf.mxu0
      %469 = vmatprep.mubr.bf16.mxu0 0
      %470 = vmatmul.mubr.bf16.gmra.mxu0 %v355
      %v471 = vpop.f32.mrf.mxu0
      %v472 = vadd.f32 %v379, %v471
      %v473 = vpop.f32.mrf.mxu0
      %v474 = vpop.f32.mrf.mxu0
      %v475 = vadd.f32 %v379, %v474
      %v476 = vpop.f32.mrf.mxu0
      %477 = vmatprep.mubr.bf16.mxu0 0
      %478 = vmatmul.mubr.bf16.gmra.mxu0 %v356
      %v479 = vpop.f32.mrf.mxu0
      %v480 = vadd.f32 %v379, %v479
      %v481 = vpop.f32.mrf.mxu0
      %v482 = vpop.f32.mrf.mxu0
      %v483 = vadd.f32 %v379, %v482
      %v484 = vpop.f32.mrf.mxu0
      %485 = vmatprep.mubr.bf16.mxu0 0
      %486 = vmatmul.mubr.bf16.gmra.mxu0 %v357
      %v487 = vpop.f32.mrf.mxu0
      %v488 = vadd.f32 %v379, %v487
      %v489 = vpop.f32.mrf.mxu0
      %v490 = vpop.f32.mrf.mxu0
      %v491 = vadd.f32 %v379, %v490
      %v492 = vpop.f32.mrf.mxu0
      %493 = vdwg.mxu0
      %v494 = vpack.c.bf16 %v467, %v464
      %v495 = vpack.c.bf16 %v475, %v472
      %v496 = vpack.c.bf16 %v483, %v480
      %v497 = vpack.c.bf16 %v491, %v488
      %v502 = vunpack.c.l.b16 %v494
      %v503 = vunpack.c.h.b16 %v494
      %v504 = vunpack.c.l.b16 %v495
      %v505 = vunpack.c.h.b16 %v495
      %v506 = vunpack.c.l.b16 %v496
      %v507 = vunpack.c.h.b16 %v496
      %v508 = vunpack.c.l.b16 %v497
      %v509 = vunpack.c.h.b16 %v497
      %v510 = vpack.c.b16 %v502, %v502
      %v511 = vpack.c.b16 %v503, %v503
      %v512 = vpack.c.b16 %v504, %v504
      %v513 = vpack.c.b16 %v505, %v505
      %v514 = vpack.c.b16 %v506, %v506
      %v515 = vpack.c.b16 %v507, %v507
      %v516 = vpack.c.b16 %v508, %v508
      %v517 = vpack.c.b16 %v509, %v509
      %526 = vst [vmem:[%s291] sm:$0xf] %v510
      %527 = vst [vmem:[%s291 + $0x4] sm:$0xf] %v511
      %528 = vst [vmem:[%s291 + $0x8] sm:$0xf] %v512
      %529 = vst [vmem:[%s291 + $0xc] sm:$0xf] %v513
      %530 = vst [vmem:[%s291 + $0x10] sm:$0xf] %v514
      %531 = vst [vmem:[%s291 + $0x14] sm:$0xf] %v515
      %532 = vst [vmem:[%s291 + $0x18] sm:$0xf] %v516
      %533 = vst [vmem:[%s291 + $0x1c] sm:$0xf] %v517
      %v534 = vunpack.c.l.bf16 %v494
      %v535 = vunpack.c.h.bf16 %v494
      %v536 = vunpack.c.l.bf16 %v495
      %v537 = vunpack.c.h.bf16 %v495
      %v538 = vunpack.c.l.bf16 %v496
      %v539 = vunpack.c.h.bf16 %v496
      %v540 = vunpack.c.l.bf16 %v497
      %v541 = vunpack.c.h.bf16 %v497
      %v542 = vadd.f32 %v534, %v535
      %v543 = vadd.f32 %v542, %v536
      %v544 = vadd.f32 %v543, %v537
      %v545 = vadd.f32 %v544, %v538
      %v546 = vadd.f32 %v545, %v539
      %v547 = vadd.f32 %v546, %v540
      %v548 = vadd.f32 %v547, %v541
      %v549 = vrot.slane %v548, 4
      %v550 = vadd.f32 %v548, %v549
      %v551 = vrot.slane %v550, 2
      %v552 = vadd.f32 %v550, %v551
      %v553 = vrot.slane %v552, 1
      %v554 = vadd.f32 %v552, %v553
      %555 = vst [vmem:[%s295] sm:$0x1] %v554
      %v556 = vmul.f32 %v534, %v534
      %v557 = vmul.f32 %v535, %v535
      %v558 = vmul.f32 %v536, %v536
      %v559 = vmul.f32 %v537, %v537
      %v560 = vmul.f32 %v538, %v538
      %v561 = vmul.f32 %v539, %v539
      %v562 = vmul.f32 %v540, %v540
      %v563 = vmul.f32 %v541, %v541
      %v564 = vadd.f32 %v556, %v557
      %v565 = vadd.f32 %v564, %v558
      %v566 = vadd.f32 %v565, %v559
      %v567 = vadd.f32 %v566, %v560
      %v568 = vadd.f32 %v567, %v561
      %v569 = vadd.f32 %v568, %v562
      %v570 = vadd.f32 %v569, %v563
      %v571 = vrot.slane %v570, 4
      %v572 = vadd.f32 %v570, %v571
      %v573 = vrot.slane %v572, 2
      %v574 = vadd.f32 %v572, %v573
      %v575 = vrot.slane %v574, 1
      %v576 = vadd.f32 %v574, %v575
      %577 = vst [vmem:[%s298] sm:$0x1] %v576
      %s578 = smul.u32 8, %s19
      %p579 = scmp.lt.s32.totalorder %s578, 31
      %s580 = scalar_select %p579, %s578, 31
      %s581 = smul.addr %s580, 4
      %s582 = scalar_lea.vmem %s5, %s581
      %p583 = scmp.lt.s32.totalorder %s19, 3
      %s584 = scalar_select %p583, %s19, 3
      %s585 = scalar_lea.vmem %s6, %s584
      %p586 = scmp.lt.s32.totalorder %s19, 3
      %s587 = scalar_select %p586, %s19, 3
      %s588 = scalar_lea.vmem %s7, %s587
      // Predicated region
      $region41: #{logistic_regression_forward.4} parent=39 // pred_check
        %p589 = pneg %p147
      $region42: #{logistic_regression_forward.4} parent=39 // pred_check_branch
        %591 = sbr.rel (%p589) target = $region44
      $region43: #{logistic_regression_forward.4} parent=39 // pred_region
        %s592 = smul.u32 8, %s19
      $region44: #{logistic_regression_forward.4} parent=39 // pred_fallthru
        _
      // Predicated region
      $region45: #{logistic_regression_forward.4} parent=39 // pred_check
        %p593 = pneg %p173
      $region46: #{logistic_regression_forward.4} parent=39 // pred_check_branch
        %595 = sbr.rel (%p593) target = $region48
      $region47: #{logistic_regression_forward.4} parent=39 // pred_region
        _
      $region48: #{logistic_regression_forward.4} parent=39 // pred_fallthru
        _
      // Predicated region
      $region49: #{logistic_regression_forward.4} parent=39 // pred_check
        %p596 = pneg %p199
      $region50: #{logistic_regression_forward.4} parent=39 // pred_check_branch
        %598 = sbr.rel (%p596) target = $region52
      $region51: #{logistic_regression_forward.4} parent=39 // pred_region
        _
      $region52: #{logistic_regression_forward.4} parent=39 // pred_fallthru
        _
    $region40: #{logistic_regression_forward.4} parent=5 // pred_fallthru
      _
    %p599 = scmp.le.s32.totalorder 2, %s14
    // Predicated region
    $region53: #{logistic_regression_forward.4} parent=5 // pred_check
      %p600 = pneg %p599
    $region54: #{logistic_regression_forward.4} parent=5 // pred_check_branch
      %602 = sbr.rel (%p600) target = $region56
    $region55: #{logistic_regression_forward.4} parent=5 // pred_region
      %s603 = ssub.s32 %s14, 2
      // Predicated region
      $region57: #{logistic_regression_forward.4} parent=55 // pred_check
        %p604 = pneg %p153
      $region58: #{logistic_regression_forward.4} parent=55 // pred_check_branch
        %606 = sbr.rel (%p604) target = $region60
      $region59: #{logistic_regression_forward.4} parent=55 // pred_region
        %s607 = smul.u32 8, %s20
        %p608 = scmp.lt.s32.totalorder %s607, 31
        %s609 = scalar_select %p608, %s607, 31
        %s610 = smul.addr %s609, 4
        %s611 = scalar_lea.vmem %s5, %s610
      $region60: #{logistic_regression_forward.4} parent=55 // pred_fallthru
        _
      // Predicated region
      $region61: #{logistic_regression_forward.4} parent=55 // pred_check
        %p612 = pneg %p179
      $region62: #{logistic_regression_forward.4} parent=55 // pred_check_branch
        %614 = sbr.rel (%p612) target = $region64
      $region63: #{logistic_regression_forward.4} parent=55 // pred_region
        %p615 = scmp.lt.s32.totalorder %s20, 3
        %s616 = scalar_select %p615, %s20, 3
        %s617 = scalar_lea.vmem %s6, %s616
      $region64: #{logistic_regression_forward.4} parent=55 // pred_fallthru
        _
      // Predicated region
      $region65: #{logistic_regression_forward.4} parent=55 // pred_check
        %p618 = pneg %p205
      $region66: #{logistic_regression_forward.4} parent=55 // pred_check_branch
        %620 = sbr.rel (%p618) target = $region68
      $region67: #{logistic_regression_forward.4} parent=55 // pred_region
        %p621 = scmp.lt.s32.totalorder %s20, 3
        %s622 = scalar_select %p621, %s20, 3
        %s623 = scalar_lea.vmem %s7, %s622
      $region68: #{logistic_regression_forward.4} parent=55 // pred_fallthru
        _
    $region56: #{logistic_regression_forward.4} parent=5 // pred_fallthru
      _
  $region6: #{logistic_regression_forward.4} parent=0 // loop_footer
    %s18 = sadd.s32 1, %s14
  $region7: #{logistic_regression_forward.4} parent=0 // loop_footer_branch
    %13 = sbr.rel target = $region3
  $region8: #{logistic_regression_forward.4} parent=0 // loop_exit
    _

</llo_original>
